<compile_context>
chip_gen: v6e
topology: v6e:2x2x1
jax: 0.10.0
libtpu: 0.0.40
codegen_flags: <defaults>
</compile_context>

<pallas_src>
import math

import jax
import jax.numpy as jnp
from jax.experimental import pallas as pl
from jax.experimental.pallas import tpu as pltpu

# UCShiftPairwiseLoss default hyper-parameters
MARGIN = 0.0
LA, UA = 10.0, 110.0
LAMBDA_G = 1.0
K_REG = 3.0          # reg_type = 'exp_3'
S = 30.0

NEG_FILL = -10.0 * S          # module's -10 sentinel, already s-scaled
S_MARGIN = MARGIN * S

# A&S 4.4.45 degree-3 acos(x) = sqrt(1-x)*poly3(x) on [0,1], |err| <= 6.7e-5,
# with the module's `s` scale folded into the coefficients.
_ACOS_S = tuple(S * c for c in (1.5707288, -0.2121144, 0.0742610, -0.0187293))
_S_PI = S * math.pi


def _s_acos(x):
    """S * acos(x); only one EUP op (sqrt) per element; safe for |x| >= 1."""
    ax = jnp.abs(x)
    p = _ACOS_S[3]
    p = p * ax + _ACOS_S[2]
    p = p * ax + _ACOS_S[1]
    p = p * ax + _ACOS_S[0]
    t = jnp.sqrt(jnp.maximum(1.0 - ax, 0.0)) * p
    return jnp.where(x < 0.0, _S_PI - t, t)


def _pairwise_kernel(fi_ref, fT_ref, row_ref, col_ref, loss_ref,
                     loss_acc, m_p, l_p, m_n, l_n):
    i = pl.program_id(1)          # row-tile axis
    j = pl.program_id(2)          # column-tile axis (innermost, online LSE)

    @pl.when(jnp.logical_and(i == 0, j == 0))
    def _init_partial():
        loss_acc[...] = jnp.zeros_like(loss_acc)

    @pl.when(j == 0)
    def _init_row_tile():
        m_p[...] = jnp.full_like(m_p, -jnp.inf)
        m_n[...] = jnp.full_like(m_n, -jnp.inf)
        l_p[...] = jnp.zeros_like(l_p)
        l_n[...] = jnp.zeros_like(l_n)

    fi = fi_ref[...]              # (tb, D)  normalized feature rows
    fT = fT_ref[...]              # (D, tn)  normalized features^T, column tile
    uc_i = row_ref[:, 0:1]        # (tb, 1)  s * uc
    lab_i = row_ref[:, 1:2]       # (tb, 1)  labels (as f32, exact for ints < 2^24)
    uc_j = col_ref[0:1, :]        # (1, tn)
    lab_j = col_ref[1:2, :]       # (1, tn)

    # cos(theta_ij) = <fhat_i,fhat_j> on the MXU; S*theta via the folded poly
    # (theta == 2*asin(||fhat_i - fhat_j||/2) for unit vectors).
    cos = jnp.dot(fi, fT, preferred_element_type=jnp.float32)      # (tb, tn)
    theta_s = _s_acos(cos)

    mask = lab_i == lab_j
    ucsum_s = uc_i + uc_j                                          # s*(uc_i+uc_j)

    pos_val = theta_s - ucsum_s
    if S_MARGIN != 0.0:
        pos_val = pos_val + S_MARGIN
    s_pos = jnp.where(mask, pos_val, NEG_FILL)
    s_neg = jnp.where(mask, NEG_FILL, -theta_s - ucsum_s)

    # Online (flash-style) logsumexp along the column axis.
    mp_new = jnp.maximum(m_p[...], jnp.max(s_pos, axis=1, keepdims=True))
    l_p[...] = (l_p[...] * jnp.exp(m_p[...] - mp_new)
                + jnp.sum(jnp.exp(s_pos - mp_new), axis=1, keepdims=True))
    m_p[...] = mp_new

    mn_new = jnp.maximum(m_n[...], jnp.max(s_neg, axis=1, keepdims=True))
    l_n[...] = (l_n[...] * jnp.exp(m_n[...] - mn_new)
                + jnp.sum(jnp.exp(s_neg - mn_new), axis=1, keepdims=True))
    m_n[...] = mn_new

    @pl.when(j == pl.num_programs(2) - 1)
    def _finish_row_tile():
        z = m_p[...] + jnp.log(l_p[...]) + m_n[...] + jnp.log(l_n[...])   # (tb,1)
        sp = jnp.maximum(z, 0.0) + jnp.log(1.0 + jnp.exp(-jnp.abs(z)))    # softplus
        loss_acc[...] += jnp.sum(sp, axis=0, keepdims=True)               # bcast (1,128)

    @pl.when(jnp.logical_and(i == pl.num_programs(1) - 1,
                             j == pl.num_programs(2) - 1))
    def _finalize_partial():
        loss_ref[...] = loss_acc[...]


def _is_v7():
    try:
        return "v7" in jax.devices()[0].device_kind.lower()
    except Exception:
        return False


def uc_shift_pairwise_loss(feat, uc, label, *, tb=None, tn=None, n_partials=None):
    """Pallas implementation of UCShiftPairwiseLoss.forward(feat, uc, label)."""
    B, D = feat.shape
    is_v7 = _is_v7()

    # O(B*D) prep + O(B) regularizer in the wrapper; only the O(B^2) pairwise
    # hot path runs in the kernel.
    feat32 = feat.astype(jnp.float32)
    norms = jnp.sqrt(jnp.sum(feat32 * feat32, axis=-1, keepdims=True))       # (B,1)
    fhat = (feat32 / jnp.maximum(norms, 1e-12)).astype(feat.dtype)
    fhat_t = fhat.T                                                          # (D,B)

    # BaseUCLoss.g with reg_type 'exp_3' (lane-sparse O(B) work -> wrapper).
    nx = (norms[:, 0] - LA) / (UA - LA)
    ug = 2.7183 ** (-K_REG)
    reg = jnp.mean((jnp.exp(-nx * K_REG) / K_REG + ug * nx) / (1.0 - ug)) * LAMBDA_G

    # Fused side inputs: rows (B,2)=[s*uc, label], columns (2,B).
    uc_s = (uc.astype(jnp.float32) * S).reshape(B, 1)
    lab_f = label.astype(jnp.float32).reshape(B, 1)   # exact for class ids < 2^24
    side = jnp.concatenate([uc_s, lab_f], axis=1)
    row_side = side                                   # (B, 2)
    col_side = side.T                                 # (2, B)

    # Leading partial axis: split across the 2 TCs only on v7x.
    n_par = n_partials if n_partials is not None else (2 if is_v7 else 1)
    if n_par < 1 or B % n_par != 0 or (n_par > 1 and (B // n_par) % 8 != 0):
        n_par = 1
    rows_per = B // n_par

    # Compute-bound: cap the row tile at 256.
    if tb is None:
        tb = next((c for c in (256, 128, 64, 32, 16, 8) if rows_per % c == 0),
                  rows_per)
    assert rows_per % tb == 0, "row tile must divide rows-per-partial"
    n_i = rows_per // tb

    # Column tile with online LSE: working set independent of B.
    if tn is None:
        tn = next((c for c in (512, 256, 128) if B % c == 0), B)
    assert B % tn == 0, "column tile must divide batch"
    n_j = B // tn

    row_map = lambda c, i, j: (c * n_i + i, 0)
    fT_map = lambda c, i, j: (0, j)
    colside_map = lambda c, i, j: (0, j)
    out_map = lambda c, i, j: (0, c)

    if n_par > 1:
        lead = pltpu.CORE_PARALLEL if is_v7 else pltpu.PARALLEL
    else:
        lead = pltpu.ARBITRARY
    vmem_limit = (40 if is_v7 else 64) * 1024 * 1024

    loss_part = pl.pallas_call(
        _pairwise_kernel,
        out_shape=jax.ShapeDtypeStruct((1, n_par * 128), jnp.float32),
        grid_spec=pltpu.PrefetchScalarGridSpec(
            num_scalar_prefetch=0,
            grid=(n_par, n_i, n_j),
            in_specs=[
                pl.BlockSpec((tb, D), row_map),       # normalized feature rows
                pl.BlockSpec((D, tn), fT_map),        # normalized features^T tile
                pl.BlockSpec((tb, 2), row_map),       # [s*uc, label] rows
                pl.BlockSpec((2, tn), colside_map),   # [s*uc, label] columns
            ],
            out_specs=pl.BlockSpec((1, 128), out_map),
            scratch_shapes=[pltpu.VMEM((1, 128), jnp.float32),   # loss partial
                            pltpu.VMEM((tb, 1), jnp.float32),    # m_pos
                            pltpu.VMEM((tb, 1), jnp.float32),    # l_pos
                            pltpu.VMEM((tb, 1), jnp.float32),    # m_neg
                            pltpu.VMEM((tb, 1), jnp.float32)],   # l_neg
        ),
        compiler_params=pltpu.CompilerParams(
            dimension_semantics=(lead, pltpu.ARBITRARY, pltpu.ARBITRARY),
            vmem_limit_bytes=vmem_limit),
    )(fhat, fhat_t, row_side, col_side)

    # Each (1,128) partial block holds the same value in every lane.
    loss = jnp.sum(loss_part[0, ::128]) / B

    # forward(): loss/s + (reg - reg.detach()); module returns (value, 0, 0).
    value = loss / S + (reg - jax.lax.stop_gradient(reg))
    return value, 0, 0


def _reference(feat, uc, label):
    """Pure-JAX reference mirroring the PyTorch module (default config)."""
    feat = feat.astype(jnp.float32)
    norms = jnp.sqrt(jnp.sum(feat * feat, axis=-1))
    nx = (norms - LA) / (UA - LA)
    ug = 2.7183 ** (-K_REG)
    reg = jnp.mean((jnp.exp(-nx * K_REG) / K_REG + ug * nx) / (1.0 - ug)) * LAMBDA_G

    mask = (label[:, None] == label[None, :]).astype(jnp.float32)
    fhat = feat / jnp.maximum(norms[:, None], 1e-12)
    diff = fhat[:, None, :] - fhat[None, :, :]
    dist = jnp.sqrt(jnp.sum(diff * diff, axis=-1))        # cdist ("donot_use_mm")
    similarity = -dist
    ucsum = uc[:, None] + uc[None, :]
    correction = -(mask * (ucsum - MARGIN)) + (1.0 - mask) * ucsum
    similarity = jnp.arcsin(jnp.clip(similarity / 2.0, -1.0, 1.0)) * 2.0
    similarity = similarity - correction
    s_pos = -similarity * mask - 10.0 * (1.0 - mask)
    s_neg = similarity * (1.0 - mask) - 10.0 * mask
    logit_p = jax.nn.logsumexp(s_pos * S, axis=-1)
    logit_n = jax.nn.logsumexp(s_neg * S, axis=-1)
    loss = jnp.mean(jax.nn.softplus(logit_p + logit_n))
    return loss / S + (reg - jax.lax.stop_gradient(reg))


if __name__ == "__main__":
    key = jax.random.PRNGKey(0)
    k1, k2 = jax.random.split(key, 2)
    B, D, n_cls = 64, 32, 4
    feat = jax.random.normal(k1, (B, D), jnp.float32) * 5.0        # norms ~ 28
    uc = jax.random.uniform(k2, (B,), jnp.float32, 0.0, 0.3)       # per-sample uncertainty
    label = jnp.arange(B, dtype=jnp.int32) % n_cls                 # every class has >1 member

    out, _, _ = uc_shift_pairwise_loss(feat, uc, label)
    out = jax.block_until_ready(out)

    ref = _reference(feat, uc, label)
    assert jnp.isfinite(out), out
    # Tolerance covers the degree-3 acos (|err|<=6.7e-5 pre-scale, Lipschitz-bounded
    # through LSE/softplus) and MXU-matmul cos vs. exact pairwise cdist.
    assert jnp.allclose(out, ref, rtol=2e-3, atol=2e-3), (out, ref)
    print("KERNEL_OK")
</pallas_src>

<mosaic_0001>
module attributes {stable_mosaic.version = 11 : i64} {
  func.func @_pairwise_kernel(%arg0: i32, %arg1: i32, %arg2: i32, %arg3: memref<64x32xf32, #tpu.memory_space<vmem>>, %arg4: memref<32x64xf32, #tpu.memory_space<vmem>>, %arg5: memref<64x2xf32, #tpu.memory_space<vmem>>, %arg6: memref<2x64xf32, #tpu.memory_space<vmem>>, %arg7: memref<1x128xf32, #tpu.memory_space<vmem>>, %arg8: memref<1x128xf32, #tpu.memory_space<vmem>>, %arg9: memref<64x1xf32, #tpu.memory_space<vmem>>, %arg10: memref<64x1xf32, #tpu.memory_space<vmem>>, %arg11: memref<64x1xf32, #tpu.memory_space<vmem>>, %arg12: memref<64x1xf32, #tpu.memory_space<vmem>>) attributes {dimension_semantics = [#tpu.dimension_semantics<arbitrary>, #tpu.dimension_semantics<arbitrary>, #tpu.dimension_semantics<arbitrary>], iteration_bounds = array<i64: 1, 1, 1>, scalar_prefetch = 0 : i64, scratch_operands = 5 : i64, tpu.core_type = #tpu.core_type<tc>, window_params = [{transform_indices = @transform_0, window_bounds = array<i64: 64, 32>}, {transform_indices = @transform_1, window_bounds = array<i64: 32, 64>}, {transform_indices = @transform_2, window_bounds = array<i64: 64, 2>}, {transform_indices = @transform_3, window_bounds = array<i64: 2, 64>}, {transform_indices = @transform_4, window_bounds = array<i64: 1, 128>}]} {
    %c0_i32 = arith.constant 0 : i32
    %0 = arith.cmpi eq, %arg1, %c0_i32 : i32
    %c0_i32_0 = arith.constant 0 : i32
    %1 = arith.cmpi eq, %arg2, %c0_i32_0 : i32
    %2 = arith.andi %0, %1 : i1
    %3 = arith.extui %2 : i1 to i32
    %c0_i32_1 = arith.constant 0 : i32
    %4 = arith.cmpi ne, %3, %c0_i32_1 : i32
    scf.if %4 {
      %cst_54 = arith.constant 0.000000e+00 : f32
      %93 = vector.broadcast %cst_54 : f32 to vector<1x128xf32>
      %c0_55 = arith.constant 0 : index
      %c0_56 = arith.constant 0 : index
      %94 = vector.load %arg8[%c0_55, %c0_56] : memref<1x128xf32, #tpu.memory_space<vmem>>, vector<1x128xf32>
      tpu.vector_store %arg8[%c0_55, %c0_56], %93 {strides = array<i32>} : memref<1x128xf32, #tpu.memory_space<vmem>>, vector<1x128xf32>,
    } else {
    }
    %c0_i32_2 = arith.constant 0 : i32
    %5 = arith.cmpi eq, %arg2, %c0_i32_2 : i32
    %6 = arith.extui %5 : i1 to i32
    %c0_i32_3 = arith.constant 0 : i32
    %7 = arith.cmpi ne, %6, %c0_i32_3 : i32
    scf.if %7 {
      %cst_54 = arith.constant 0xFF800000 : f32
      %93 = vector.broadcast %cst_54 : f32 to vector<64x1xf32>
      %c0_55 = arith.constant 0 : index
      %c0_56 = arith.constant 0 : index
      %94 = vector.load %arg9[%c0_55, %c0_56] : memref<64x1xf32, #tpu.memory_space<vmem>>, vector<64x1xf32>
      tpu.vector_store %arg9[%c0_55, %c0_56], %93 {strides = array<i32>} : memref<64x1xf32, #tpu.memory_space<vmem>>, vector<64x1xf32>,
      %cst_57 = arith.constant 0xFF800000 : f32
      %95 = vector.broadcast %cst_57 : f32 to vector<64x1xf32>
      %c0_58 = arith.constant 0 : index
      %c0_59 = arith.constant 0 : index
      %96 = vector.load %arg11[%c0_58, %c0_59] : memref<64x1xf32, #tpu.memory_space<vmem>>, vector<64x1xf32>
      tpu.vector_store %arg11[%c0_58, %c0_59], %95 {strides = array<i32>} : memref<64x1xf32, #tpu.memory_space<vmem>>, vector<64x1xf32>,
      %cst_60 = arith.constant 0.000000e+00 : f32
      %97 = vector.broadcast %cst_60 : f32 to vector<64x1xf32>
      %c0_61 = arith.constant 0 : index
      %c0_62 = arith.constant 0 : index
      %98 = vector.load %arg10[%c0_61, %c0_62] : memref<64x1xf32, #tpu.memory_space<vmem>>, vector<64x1xf32>
      tpu.vector_store %arg10[%c0_61, %c0_62], %97 {strides = array<i32>} : memref<64x1xf32, #tpu.memory_space<vmem>>, vector<64x1xf32>,
      %cst_63 = arith.constant 0.000000e+00 : f32
      %99 = vector.broadcast %cst_63 : f32 to vector<64x1xf32>
      %c0_64 = arith.constant 0 : index
      %c0_65 = arith.constant 0 : index
      %100 = vector.load %arg12[%c0_64, %c0_65] : memref<64x1xf32, #tpu.memory_space<vmem>>, vector<64x1xf32>
      tpu.vector_store %arg12[%c0_64, %c0_65], %99 {strides = array<i32>} : memref<64x1xf32, #tpu.memory_space<vmem>>, vector<64x1xf32>,
    } else {
    }
    %c0 = arith.constant 0 : index
    %c0_4 = arith.constant 0 : index
    %8 = vector.load %arg3[%c0, %c0_4] : memref<64x32xf32, #tpu.memory_space<vmem>>, vector<64x32xf32>
    %c0_5 = arith.constant 0 : index
    %c0_6 = arith.constant 0 : index
    %9 = vector.load %arg4[%c0_5, %c0_6] : memref<32x64xf32, #tpu.memory_space<vmem>>, vector<32x64xf32>
    %c0_7 = arith.constant 0 : index
    %c0_8 = arith.constant 0 : index
    %10 = vector.load %arg5[%c0_7, %c0_8] : memref<64x2xf32, #tpu.memory_space<vmem>>, vector<64x1xf32>
    %c0_9 = arith.constant 0 : index
    %c1 = arith.constant 1 : index
    %11 = vector.load %arg5[%c0_9, %c1] : memref<64x2xf32, #tpu.memory_space<vmem>>, vector<64x1xf32>
    %c0_10 = arith.constant 0 : index
    %c0_11 = arith.constant 0 : index
    %12 = vector.load %arg6[%c0_10, %c0_11] : memref<2x64xf32, #tpu.memory_space<vmem>>, vector<1x64xf32>
    %c1_12 = arith.constant 1 : index
    %c0_13 = arith.constant 0 : index
    %13 = vector.load %arg6[%c1_12, %c0_13] : memref<2x64xf32, #tpu.memory_space<vmem>>, vector<1x64xf32>
    %cst = arith.constant dense<0.000000e+00> : vector<64x64xf32>
    %14 = tpu.matmul %8, %9, %cst {dimension_numbers = #tpu.dot_dimension_numbers<[1], [0], [0], [1], [0, 0, 1, 1], [], []>} : vector<64x32xf32>, vector<32x64xf32>, vector<64x64xf32> -> vector<64x64xf32>
    %15 = math.absf %14 : vector<64x64xf32>
    %cst_14 = arith.constant -5.618790e-01 : f32
    %16 = vector.broadcast %cst_14 : f32 to vector<64x64xf32>
    %17 = arith.mulf %16, %15 : vector<64x64xf32>
    %cst_15 = arith.constant 2.227830e+00 : f32
    %18 = vector.broadcast %cst_15 : f32 to vector<64x64xf32>
    %19 = arith.addf %17, %18 : vector<64x64xf32>
    %20 = arith.mulf %19, %15 : vector<64x64xf32>
    %cst_16 = arith.constant -6.36343193 : f32
    %21 = vector.broadcast %cst_16 : f32 to vector<64x64xf32>
    %22 = arith.addf %20, %21 : vector<64x64xf32>
    %23 = arith.mulf %22, %15 : vector<64x64xf32>
    %cst_17 = arith.constant 47.1218643 : f32
    %24 = vector.broadcast %cst_17 : f32 to vector<64x64xf32>
    %25 = arith.addf %23, %24 : vector<64x64xf32>
    %cst_18 = arith.constant 1.000000e+00 : f32
    %26 = vector.broadcast %cst_18 : f32 to vector<64x64xf32>
    %27 = arith.subf %26, %15 : vector<64x64xf32>
    %cst_19 = arith.constant 0.000000e+00 : f32
    %28 = vector.broadcast %cst_19 : f32 to vector<64x64xf32>
    %29 = arith.maximumf %27, %28 : vector<64x64xf32>
    %30 = math.sqrt %29 : vector<64x64xf32>
    %31 = arith.mulf %30, %25 : vector<64x64xf32>
    %cst_20 = arith.constant 0.000000e+00 : f32
    %32 = vector.broadcast %cst_20 : f32 to vector<64x64xf32>
    %33 = arith.cmpf olt, %14, %32 : vector<64x64xf32>
    %cst_21 = arith.constant 94.2477798 : f32
    %34 = vector.broadcast %cst_21 : f32 to vector<64x64xf32>
    %35 = arith.subf %34, %31 : vector<64x64xf32>
    %36 = arith.select %33, %35, %31 : vector<64x64xi1>, vector<64x64xf32>
    %37 = vector.broadcast %11 : vector<64x1xf32> to vector<64x64xf32>
    %38 = vector.broadcast %13 : vector<1x64xf32> to vector<64x64xf32>
    %39 = arith.cmpf oeq, %37, %38 : vector<64x64xf32>
    %40 = vector.broadcast %10 : vector<64x1xf32> to vector<64x64xf32>
    %41 = vector.broadcast %12 : vector<1x64xf32> to vector<64x64xf32>
    %42 = arith.addf %40, %41 : vector<64x64xf32>
    %43 = arith.subf %36, %42 : vector<64x64xf32>
    %cst_22 = arith.constant -3.000000e+02 : f32
    %44 = vector.broadcast %cst_22 : f32 to vector<64x64xf32>
    %45 = arith.select %39, %43, %44 : vector<64x64xi1>, vector<64x64xf32>
    %cst_23 = arith.constant 0.000000e+00 : f32
    %46 = vector.broadcast %cst_23 : f32 to vector<64x64xf32>
    %47 = arith.subf %46, %36 : vector<64x64xf32>
    %48 = arith.subf %47, %42 : vector<64x64xf32>
    %cst_24 = arith.constant -3.000000e+02 : f32
    %49 = vector.broadcast %cst_24 : f32 to vector<64x64xf32>
    %50 = arith.select %39, %49, %48 : vector<64x64xi1>, vector<64x64xf32>
    %c0_25 = arith.constant 0 : index
    %c0_26 = arith.constant 0 : index
    %51 = vector.load %arg9[%c0_25, %c0_26] : memref<64x1xf32, #tpu.memory_space<vmem>>, vector<64x1xf32>
    %cst_27 = arith.constant dense<0xFF800000> : vector<64xf32>
    %52 = vector.multi_reduction <maximumf>, %45, %cst_27 [1] : vector<64x64xf32> to vector<64xf32>
    %53 = vector.shape_cast %52 : vector<64xf32> to vector<64x1xf32>
    %54 = arith.maximumf %51, %53 : vector<64x1xf32>
    %c0_28 = arith.constant 0 : index
    %c0_29 = arith.constant 0 : index
    %55 = vector.load %arg10[%c0_28, %c0_29] : memref<64x1xf32, #tpu.memory_space<vmem>>, vector<64x1xf32>
    %c0_30 = arith.constant 0 : index
    %c0_31 = arith.constant 0 : index
    %56 = vector.load %arg9[%c0_30, %c0_31] : memref<64x1xf32, #tpu.memory_space<vmem>>, vector<64x1xf32>
    %57 = arith.subf %56, %54 : vector<64x1xf32>
    %58 = math.exp %57 : vector<64x1xf32>
    %59 = arith.mulf %55, %58 : vector<64x1xf32>
    %60 = vector.broadcast %54 : vector<64x1xf32> to vector<64x64xf32>
    %61 = arith.subf %45, %60 : vector<64x64xf32>
    %62 = math.exp %61 : vector<64x64xf32>
    %cst_32 = arith.constant dense<0.000000e+00> : vector<64xf32>
    %63 = vector.multi_reduction <add>, %62, %cst_32 [1] : vector<64x64xf32> to vector<64xf32>
    %64 = vector.shape_cast %63 : vector<64xf32> to vector<64x1xf32>
    %65 = arith.addf %59, %64 : vector<64x1xf32>
    %c0_33 = arith.constant 0 : index
    %c0_34 = arith.constant 0 : index
    %66 = vector.load %arg10[%c0_33, %c0_34] : memref<64x1xf32, #tpu.memory_space<vmem>>, vector<64x1xf32>
    tpu.vector_store %arg10[%c0_33, %c0_34], %65 {strides = array<i32>} : memref<64x1xf32, #tpu.memory_space<vmem>>, vector<64x1xf32>,
    %c0_35 = arith.constant 0 : index
    %c0_36 = arith.constant 0 : index
    %67 = vector.load %arg9[%c0_35, %c0_36] : memref<64x1xf32, #tpu.memory_space<vmem>>, vector<64x1xf32>
    tpu.vector_store %arg9[%c0_35, %c0_36], %54 {strides = array<i32>} : memref<64x1xf32, #tpu.memory_space<vmem>>, vector<64x1xf32>,
    %c0_37 = arith.constant 0 : index
    %c0_38 = arith.constant 0 : index
    %68 = vector.load %arg11[%c0_37, %c0_38] : memref<64x1xf32, #tpu.memory_space<vmem>>, vector<64x1xf32>
    %cst_39 = arith.constant dense<0xFF800000> : vector<64xf32>
    %69 = vector.multi_reduction <maximumf>, %50, %cst_39 [1] : vector<64x64xf32> to vector<64xf32>
    %70 = vector.shape_cast %69 : vector<64xf32> to vector<64x1xf32>
    %71 = arith.maximumf %68, %70 : vector<64x1xf32>
    %c0_40 = arith.constant 0 : index
    %c0_41 = arith.constant 0 : index
    %72 = vector.load %arg12[%c0_40, %c0_41] : memref<64x1xf32, #tpu.memory_space<vmem>>, vector<64x1xf32>
    %c0_42 = arith.constant 0 : index
    %c0_43 = arith.constant 0 : index
    %73 = vector.load %arg11[%c0_42, %c0_43] : memref<64x1xf32, #tpu.memory_space<vmem>>, vector<64x1xf32>
    %74 = arith.subf %73, %71 : vector<64x1xf32>
    %75 = math.exp %74 : vector<64x1xf32>
    %76 = arith.mulf %72, %75 : vector<64x1xf32>
    %77 = vector.broadcast %71 : vector<64x1xf32> to vector<64x64xf32>
    %78 = arith.subf %50, %77 : vector<64x64xf32>
    %79 = math.exp %78 : vector<64x64xf32>
    %cst_44 = arith.constant dense<0.000000e+00> : vector<64xf32>
    %80 = vector.multi_reduction <add>, %79, %cst_44 [1] : vector<64x64xf32> to vector<64xf32>
    %81 = vector.shape_cast %80 : vector<64xf32> to vector<64x1xf32>
    %82 = arith.addf %76, %81 : vector<64x1xf32>
    %c0_45 = arith.constant 0 : index
    %c0_46 = arith.constant 0 : index
    %83 = vector.load %arg12[%c0_45, %c0_46] : memref<64x1xf32, #tpu.memory_space<vmem>>, vector<64x1xf32>
    tpu.vector_store %arg12[%c0_45, %c0_46], %82 {strides = array<i32>} : memref<64x1xf32, #tpu.memory_space<vmem>>, vector<64x1xf32>,
    %c0_47 = arith.constant 0 : index
    %c0_48 = arith.constant 0 : index
    %84 = vector.load %arg11[%c0_47, %c0_48] : memref<64x1xf32, #tpu.memory_space<vmem>>, vector<64x1xf32>
    tpu.vector_store %arg11[%c0_47, %c0_48], %71 {strides = array<i32>} : memref<64x1xf32, #tpu.memory_space<vmem>>, vector<64x1xf32>,
    %c0_i32_49 = arith.constant 0 : i32
    %85 = arith.cmpi eq, %arg2, %c0_i32_49 : i32
    %86 = arith.extui %85 : i1 to i32
    %c0_i32_50 = arith.constant 0 : i32
    %87 = arith.cmpi ne, %86, %c0_i32_50 : i32
    scf.if %87 {
      %c0_54 = arith.constant 0 : index
      %c0_55 = arith.constant 0 : index
      %93 = vector.load %arg9[%c0_54, %c0_55] : memref<64x1xf32, #tpu.memory_space<vmem>>, vector<64x1xf32>
      %c0_56 = arith.constant 0 : index
      %c0_57 = arith.constant 0 : index
      %94 = vector.load %arg10[%c0_56, %c0_57] : memref<64x1xf32, #tpu.memory_space<vmem>>, vector<64x1xf32>
      %95 = math.log %94 : vector<64x1xf32>
      %96 = arith.addf %93, %95 : vector<64x1xf32>
      %c0_58 = arith.constant 0 : index
      %c0_59 = arith.constant 0 : index
      %97 = vector.load %arg11[%c0_58, %c0_59] : memref<64x1xf32, #tpu.memory_space<vmem>>, vector<64x1xf32>
      %98 = arith.addf %96, %97 : vector<64x1xf32>
      %c0_60 = arith.constant 0 : index
      %c0_61 = arith.constant 0 : index
      %99 = vector.load %arg12[%c0_60, %c0_61] : memref<64x1xf32, #tpu.memory_space<vmem>>, vector<64x1xf32>
      %100 = math.log %99 : vector<64x1xf32>
      %101 = arith.addf %98, %100 : vector<64x1xf32>
      %cst_62 = arith.constant 0.000000e+00 : f32
      %102 = vector.broadcast %cst_62 : f32 to vector<64x1xf32>
      %103 = arith.maximumf %101, %102 : vector<64x1xf32>
      %104 = math.absf %101 : vector<64x1xf32>
      %cst_63 = arith.constant 0.000000e+00 : f32
      %105 = vector.broadcast %cst_63 : f32 to vector<64x1xf32>
      %106 = arith.subf %105, %104 : vector<64x1xf32>
      %107 = math.exp %106 : vector<64x1xf32>
      %cst_64 = arith.constant 1.000000e+00 : f32
      %108 = vector.broadcast %cst_64 : f32 to vector<64x1xf32>
      %109 = arith.addf %108, %107 : vector<64x1xf32>
      %110 = math.log %109 : vector<64x1xf32>
      %111 = arith.addf %103, %110 : vector<64x1xf32>
      %c0_65 = arith.constant 0 : index
      %c0_66 = arith.constant 0 : index
      %112 = vector.load %arg8[%c0_65, %c0_66] : memref<1x128xf32, #tpu.memory_space<vmem>>, vector<1x128xf32>
      %cst_67 = arith.constant dense<0.000000e+00> : vector<1xf32>
      %113 = vector.multi_reduction <add>, %111, %cst_67 [0] : vector<64x1xf32> to vector<1xf32>
      %114 = vector.shape_cast %113 : vector<1xf32> to vector<1x1xf32>
      %115 = vector.broadcast %114 : vector<1x1xf32> to vector<1x128xf32>
      %116 = arith.addf %112, %115 : vector<1x128xf32>
      %c0_68 = arith.constant 0 : index
      %c0_69 = arith.constant 0 : index
      %117 = vector.load %arg8[%c0_68, %c0_69] : memref<1x128xf32, #tpu.memory_space<vmem>>, vector<1x128xf32>
      tpu.vector_store %arg8[%c0_68, %c0_69], %116 {strides = array<i32>} : memref<1x128xf32, #tpu.memory_space<vmem>>, vector<1x128xf32>,
    } else {
    }
    %c0_i32_51 = arith.constant 0 : i32
    %88 = arith.cmpi eq, %arg1, %c0_i32_51 : i32
    %c0_i32_52 = arith.constant 0 : i32
    %89 = arith.cmpi eq, %arg2, %c0_i32_52 : i32
    %90 = arith.andi %88, %89 : i1
    %91 = arith.extui %90 : i1 to i32
    %c0_i32_53 = arith.constant 0 : i32
    %92 = arith.cmpi ne, %91, %c0_i32_53 : i32
    scf.if %92 {
      %c0_54 = arith.constant 0 : index
      %c0_55 = arith.constant 0 : index
      %93 = vector.load %arg8[%c0_54, %c0_55] : memref<1x128xf32, #tpu.memory_space<vmem>>, vector<1x128xf32>
      %c0_56 = arith.constant 0 : index
      %c0_57 = arith.constant 0 : index
      %94 = vector.load %arg7[%c0_56, %c0_57] : memref<1x128xf32, #tpu.memory_space<vmem>>, vector<1x128xf32>
      tpu.vector_store %arg7[%c0_56, %c0_57], %93 {strides = array<i32>} : memref<1x128xf32, #tpu.memory_space<vmem>>, vector<1x128xf32>,
    } else {
    }
    return
  }
  func.func @transform_0(%arg0: i32, %arg1: i32, %arg2: i32) -> (i32, i32) {
    %c1_i32 = arith.constant 1 : i32
    %0 = arith.muli %arg0, %c1_i32 : i32
    %1 = arith.addi %0, %arg1 : i32
    %c0_i32 = arith.constant 0 : i32
    %c0_i32_0 = arith.constant 0 : i32
    return %1, %c0_i32 : i32, i32
  }
  func.func @transform_1(%arg0: i32, %arg1: i32, %arg2: i32) -> (i32, i32) {
    %c0_i32 = arith.constant 0 : i32
    %c0_i32_0 = arith.constant 0 : i32
    return %c0_i32, %arg2 : i32, i32
  }
  func.func @transform_2(%arg0: i32, %arg1: i32, %arg2: i32) -> (i32, i32) {
    %c1_i32 = arith.constant 1 : i32
    %0 = arith.muli %arg0, %c1_i32 : i32
    %1 = arith.addi %0, %arg1 : i32
    %c0_i32 = arith.constant 0 : i32
    %c0_i32_0 = arith.constant 0 : i32
    return %1, %c0_i32 : i32, i32
  }
  func.func @transform_3(%arg0: i32, %arg1: i32, %arg2: i32) -> (i32, i32) {
    %c0_i32 = arith.constant 0 : i32
    %c0_i32_0 = arith.constant 0 : i32
    return %c0_i32, %arg2 : i32, i32
  }
  func.func @transform_4(%arg0: i32, %arg1: i32, %arg2: i32) -> (i32, i32) {
    %c0_i32 = arith.constant 0 : i32
    %c0_i32_0 = arith.constant 0 : i32
    return %c0_i32, %arg0 : i32, i32
  }
}

</mosaic_0001>

<llo_original>
// kernel: tpu_custom_call.1
$region0: #{tpu_custom_call.1}
  #allocation0 [shape = 'u32[]', space=smem, size = 0x4, offset = 0x4, fixed_abs, tag = 'smem constant byte address 0x4 - core index']
  #allocation1 [shape = 'u32[144,128]{1,0:T(1,128)}', space=vmem, size = 0x12000, scoped, tag = 'internal scratch']
  #allocation2 [shape = 'f32[1,128]{1,0:T(1,128)}', space=vmem, size = 0x200, scoped, tag = 'scratch operand']
  #allocation3 [shape = 'f32[64,1]{1,0:T(8,128)}', space=vmem, size = 0x8000, scoped, tag = 'scratch operand']
  #allocation4 [shape = 'f32[64,1]{1,0:T(8,128)}', space=vmem, size = 0x8000, scoped, tag = 'scratch operand']
  #allocation5 [shape = 'f32[64,1]{1,0:T(8,128)}', space=vmem, size = 0x8000, scoped, tag = 'scratch operand']
  #allocation6 [shape = 'f32[64,1]{1,0:T(8,128)}', space=vmem, size = 0x8000, scoped, tag = 'scratch operand']
  %s0 = inlined_call_operand.vmem [shape: f32[64,32], index: 0, kind: input, shape index: {}]
  %s1 = inlined_call_operand.vmem [shape: f32[32,64], index: 1, kind: input, shape index: {}]
  %s2 = inlined_call_operand.vmem [shape: f32[64,2], index: 2, kind: input, shape index: {}]
  %s3 = inlined_call_operand.vmem [shape: f32[2,64], index: 3, kind: input, shape index: {}]
  %s4 = inlined_call_operand.hbm [shape: f32[1,128], index: 4, kind: output, shape index: {}]
  %s5 = sld [smem:[#allocation0]]
  $region42: #{tpu_custom_call.1} parent=0
    _
  %s7 = ssub.s32 1, %s5
  %s8 = scalar_select 0, %s7, %s5
  $region1: #{tpu_custom_call.1} parent=0
    #allocation7 [shape = 'u8[512]{0}', space=vmem, size = 0x400, scoped, tag = 'output window, operand 0, single buffered']
    #allocation8 [shape = 's32[1]{0}', space=sflag, size = 0x4, scoped, tag = 'scoped memory for tpu_custom_call.1']
    %9 = vsyncpa [#allocation8], 0
    // Predicated region
    $region2: #{tpu_custom_call.1} parent=1 // pred_check
      _
    $region3: #{tpu_custom_call.1} parent=1 // pred_check_branch
      %11 = sbr.rel (0) target = $region5
    $region4: #{tpu_custom_call.1} parent=1 // pred_region
      %s12 = sadd.s32 0, 0
      %s13 = smul.u32 8, %s12
      %p14 = scmp.lt.s32.totalorder %s13, 7
      %s15 = scalar_select %p14, %s13, 7
      %s16 = smul.addr %s15, 8
      %s17 = scalar_lea.vmem %s0, %s16
      %s18 = sadd.s32 0, 0
      %s19 = smul.u32 8, %s18
    $region5: #{tpu_custom_call.1} parent=1 // pred_fallthru
      _
    // Predicated region
    $region6: #{tpu_custom_call.1} parent=1 // pred_check
      _
    $region7: #{tpu_custom_call.1} parent=1 // pred_check_branch
      %21 = sbr.rel (0) target = $region9
    $region8: #{tpu_custom_call.1} parent=1 // pred_region
      _
    $region9: #{tpu_custom_call.1} parent=1 // pred_fallthru
      _
    // Predicated region
    $region10: #{tpu_custom_call.1} parent=1 // pred_check
      _
    $region11: #{tpu_custom_call.1} parent=1 // pred_check_branch
      %23 = sbr.rel (0) target = $region13
    $region12: #{tpu_custom_call.1} parent=1 // pred_region
      %s24 = sadd.s32 0, 0
      %s25 = smul.u32 8, %s24
      %p26 = scmp.lt.s32.totalorder %s25, 7
      %s27 = scalar_select %p26, %s25, 7
      %s28 = smul.addr %s27, 8
      %s29 = scalar_lea.vmem %s2, %s28
      %s30 = sadd.s32 0, 0
      %s31 = smul.u32 8, %s30
    $region13: #{tpu_custom_call.1} parent=1 // pred_fallthru
      _
    // Predicated region
    $region14: #{tpu_custom_call.1} parent=1 // pred_check
      _
    $region15: #{tpu_custom_call.1} parent=1 // pred_check_branch
      %33 = sbr.rel (0) target = $region17
    $region16: #{tpu_custom_call.1} parent=1 // pred_region
      _
    $region17: #{tpu_custom_call.1} parent=1 // pred_fallthru
      _
    %s34 = sadd.s32 0, 0
    %s35 = smul.u32 8, %s34
    %p36 = scmp.lt.s32.totalorder %s35, 7
    %s37 = scalar_select %p36, %s35, 7
    %s38 = smul.addr %s37, 8
    %s39 = scalar_lea.vmem %s0, %s38
    %s40 = sadd.s32 0, 0
    %s41 = smul.u32 8, %s40
    %p42 = scmp.lt.s32.totalorder %s41, 7
    %s43 = scalar_select %p42, %s41, 7
    %s44 = smul.addr %s43, 8
    %s45 = scalar_lea.vmem %s2, %s44
    %s46 = sadd.s32 0, 0
    %s47 = smul.u32 8, %s46
    %p48 = scmp.lt.s32.totalorder %s47, 7
    %s49 = scalar_select %p48, %s47, 7
    %s50 = smul.addr %s49, 8
    %s51 = scalar_lea.vmem %s0, %s50
    %s52 = sadd.s32 0, 0
    %s53 = smul.u32 8, %s52
    %s54 = sadd.s32 0, 0
    %s55 = smul.u32 8, %s54
    %p56 = scmp.lt.s32.totalorder %s55, 7
    %s57 = scalar_select %p56, %s55, 7
    %s58 = smul.addr %s57, 8
    %s59 = scalar_lea.vmem %s2, %s58
    %s60 = sadd.s32 0, 0
    %s61 = smul.u32 8, %s60
    %p62 = scmp.eq.s32.totalorder 0, 0
    %p63 = scmp.eq.s32.totalorder 0, 0
    %p64 = pnand %p62, %p63
    %p65 = pneg %p64
    // Predicated region
    $region18: #{tpu_custom_call.1} parent=1 // pred_check
      _
    $region19: #{tpu_custom_call.1} parent=1 // pred_check_branch
      %67 = sbr.rel (%p64) target = $region21
    $region20: #{tpu_custom_call.1} parent=1 // pred_region
      %68 = vst [vmem:[#allocation2] sm:$0x1] 0.0
    $region21: #{tpu_custom_call.1} parent=1 // pred_fallthru
      _
    // Predicated region
    $region22: #{tpu_custom_call.1} parent=1 // pred_check
      %p69 = pneg %p63
    $region23: #{tpu_custom_call.1} parent=1 // pred_check_branch
      %71 = sbr.rel (%p69) target = $region25
    $region24: #{tpu_custom_call.1} parent=1 // pred_region
      %vm72 = vcmask 7168
      %73 = vst.msk [vmem:[#allocation3] sm:$0xff] %vm72, -inf
      %74 = vst.msk [vmem:[#allocation3 + $0x8] sm:$0xff] %vm72, -inf
      %75 = vst.msk [vmem:[#allocation3 + $0x10] sm:$0xff] %vm72, -inf
      %76 = vst.msk [vmem:[#allocation3 + $0x18] sm:$0xff] %vm72, -inf
      %77 = vst.msk [vmem:[#allocation3 + $0x20] sm:$0xff] %vm72, -inf
      %78 = vst.msk [vmem:[#allocation3 + $0x28] sm:$0xff] %vm72, -inf
      %79 = vst.msk [vmem:[#allocation3 + $0x30] sm:$0xff] %vm72, -inf
      %80 = vst.msk [vmem:[#allocation3 + $0x38] sm:$0xff] %vm72, -inf
      %81 = vst.msk [vmem:[#allocation5] sm:$0xff] %vm72, -inf
      %82 = vst.msk [vmem:[#allocation5 + $0x8] sm:$0xff] %vm72, -inf
      %83 = vst.msk [vmem:[#allocation5 + $0x10] sm:$0xff] %vm72, -inf
      %84 = vst.msk [vmem:[#allocation5 + $0x18] sm:$0xff] %vm72, -inf
      %85 = vst.msk [vmem:[#allocation5 + $0x20] sm:$0xff] %vm72, -inf
      %86 = vst.msk [vmem:[#allocation5 + $0x28] sm:$0xff] %vm72, -inf
      %87 = vst.msk [vmem:[#allocation5 + $0x30] sm:$0xff] %vm72, -inf
      %88 = vst.msk [vmem:[#allocation5 + $0x38] sm:$0xff] %vm72, -inf
      %89 = vst.msk [vmem:[#allocation4] sm:$0xff] %vm72, 0.0
      %90 = vst.msk [vmem:[#allocation4 + $0x8] sm:$0xff] %vm72, 0.0
      %91 = vst.msk [vmem:[#allocation4 + $0x10] sm:$0xff] %vm72, 0.0
      %92 = vst.msk [vmem:[#allocation4 + $0x18] sm:$0xff] %vm72, 0.0
      %93 = vst.msk [vmem:[#allocation4 + $0x20] sm:$0xff] %vm72, 0.0
      %94 = vst.msk [vmem:[#allocation4 + $0x28] sm:$0xff] %vm72, 0.0
      %95 = vst.msk [vmem:[#allocation4 + $0x30] sm:$0xff] %vm72, 0.0
      %96 = vst.msk [vmem:[#allocation4 + $0x38] sm:$0xff] %vm72, 0.0
      %97 = vst.msk [vmem:[#allocation6] sm:$0xff] %vm72, 0.0
      %98 = vst.msk [vmem:[#allocation6 + $0x8] sm:$0xff] %vm72, 0.0
      %99 = vst.msk [vmem:[#allocation6 + $0x10] sm:$0xff] %vm72, 0.0
      %100 = vst.msk [vmem:[#allocation6 + $0x18] sm:$0xff] %vm72, 0.0
      %101 = vst.msk [vmem:[#allocation6 + $0x20] sm:$0xff] %vm72, 0.0
      %102 = vst.msk [vmem:[#allocation6 + $0x28] sm:$0xff] %vm72, 0.0
      %103 = vst.msk [vmem:[#allocation6 + $0x30] sm:$0xff] %vm72, 0.0
      %104 = vst.msk [vmem:[#allocation6 + $0x38] sm:$0xff] %vm72, 0.0
    $region25: #{tpu_custom_call.1} parent=1 // pred_fallthru
      _
    %v105 = vld [vmem:[%s51] sm:$0xff]
    %v106 = vld [vmem:[%s51 + $0x8] sm:$0xff]
    %v107 = vld [vmem:[%s51 + $0x10] sm:$0xff]
    %v108 = vld [vmem:[%s51 + $0x18] sm:$0xff]
    %v109 = vld [vmem:[%s51 + $0x20] sm:$0xff]
    %v110 = vld [vmem:[%s51 + $0x28] sm:$0xff]
    %v111 = vld [vmem:[%s51 + $0x30] sm:$0xff]
    %v112 = vld [vmem:[%s51 + $0x38] sm:$0xff]
    %v113 = vld [vmem:[%s1] sm:$0xff]
    %v114 = vld [vmem:[%s1 + $0x8] sm:$0xff]
    %v115 = vld [vmem:[%s1 + $0x10] sm:$0xff]
    %v116 = vld [vmem:[%s1 + $0x18] sm:$0xff]
    %v117 = vld [vmem:[%s59] sm:$0xff]
    %v118 = vld [vmem:[%s59 + $0x8] sm:$0xff]
    %v119 = vld [vmem:[%s59 + $0x10] sm:$0xff]
    %v120 = vld [vmem:[%s59 + $0x18] sm:$0xff]
    %v121 = vld [vmem:[%s59 + $0x20] sm:$0xff]
    %v122 = vld [vmem:[%s59 + $0x28] sm:$0xff]
    %v123 = vld [vmem:[%s59 + $0x30] sm:$0xff]
    %v124 = vld [vmem:[%s59 + $0x38] sm:$0xff]
    %v125 = vld [vmem:[%s3] sm:$0x1]
    %v126 = vld [vmem:[%s3 + $0x1] sm:$0x1]
    %vm127 = vcmask 261120
    %v129 = vsel %vm127, %v105, 0
    %v132 = vsel %vm127, %v106, 0
    %v135 = vsel %vm127, %v107, 0
    %v138 = vsel %vm127, %v108, 0
    %v141 = vsel %vm127, %v109, 0
    %v144 = vsel %vm127, %v110, 0
    %v147 = vsel %vm127, %v111, 0
    %v150 = vsel %vm127, %v112, 0
    %152 = vmatprep.subr.mxu0 0.0
    %153 = vmatpush1.msra.mxu0 0.0
    %154 = vmatprep.subr.mxu0 0.0
    %155 = vmatpush1.msra.mxu0 0.0
    %156 = vmatprep.subr.mxu0 0.0
    %157 = vmatpush1.msra.mxu0 0.0
    %158 = vmatprep.subr.mxu0 0.0
    %159 = vmatpush1.msra.mxu0 0.0
    %160 = vmatprep.subr.mxu0 0.0
    %161 = vmatpush1.msra.mxu0 0.0
    %162 = vmatprep.subr.mxu0 0.0
    %163 = vmatpush1.msra.mxu0 0.0
    %164 = vmatprep.subr.mxu0 0.0
    %165 = vmatpush1.msra.mxu0 0.0
    %166 = vmatprep.subr.mxu0 0.0
    %167 = vmatpush1.msra.mxu0 0.0
    %168 = vmatprep.subr.mxu0 0.0
    %169 = vmatpush1.msra.mxu0 0.0
    %170 = vmatprep.subr.mxu0 0.0
    %171 = vmatpush1.msra.mxu0 0.0
    %172 = vmatprep.subr.mxu0 0.0
    %173 = vmatpush1.msra.mxu0 0.0
    %174 = vmatprep.subr.mxu0 0.0
    %175 = vmatpush1.msra.mxu0 0.0
    %176 = vmatprep.subr.mxu0 0.0
    %177 = vmatpush1.msra.mxu0 %v116
    %178 = vmatprep.subr.mxu0 0.0
    %179 = vmatpush1.msra.mxu0 %v115
    %180 = vmatprep.subr.mxu0 0.0
    %181 = vmatpush1.msra.mxu0 %v114
    %182 = vmatprep.subr.mxu0 0.0
    %183 = vmatpush1.msra.mxu0 %v113
    %184 = vmatprep.subr.mxu0 0.0
    %185 = vmatpush2.msra.mxu0 0.0
    %186 = vmatprep.subr.mxu0 0.0
    %187 = vmatpush2.msra.mxu0 0.0
    %188 = vmatprep.subr.mxu0 0.0
    %189 = vmatpush2.msra.mxu0 0.0
    %190 = vmatprep.subr.mxu0 0.0
    %191 = vmatpush2.msra.mxu0 0.0
    %192 = vmatprep.subr.mxu0 0.0
    %193 = vmatpush2.msra.mxu0 0.0
    %194 = vmatprep.subr.mxu0 0.0
    %195 = vmatpush2.msra.mxu0 0.0
    %196 = vmatprep.subr.mxu0 0.0
    %197 = vmatpush2.msra.mxu0 0.0
    %198 = vmatprep.subr.mxu0 0.0
    %199 = vmatpush2.msra.mxu0 0.0
    %200 = vmatprep.subr.mxu0 0.0
    %201 = vmatpush2.msra.mxu0 0.0
    %202 = vmatprep.subr.mxu0 0.0
    %203 = vmatpush2.msra.mxu0 0.0
    %204 = vmatprep.subr.mxu0 0.0
    %205 = vmatpush2.msra.mxu0 0.0
    %206 = vmatprep.subr.mxu0 0.0
    %207 = vmatpush2.msra.mxu0 0.0
    %208 = vmatprep.subr.mxu0 0.0
    %209 = vmatpush2.msra.mxu0 0.0
    %210 = vmatprep.subr.mxu0 0.0
    %211 = vmatpush2.msra.mxu0 0.0
    %212 = vmatprep.subr.mxu0 0.0
    %213 = vmatpush2.msra.mxu0 0.0
    %214 = vmatprep.subr.mxu0 0.0
    %215 = vmatpush2.msra.mxu0 0.0
    %216 = vmatprep.mubr.f32.mxu0 0.0
    %217 = vmatmul.mubr.f32.gmra.mxu0 %v129
    %v218 = vpop.f32.mrf.mxu0
    %v219 = vadd.f32 0.0, %v218
    %v220 = vpop.f32.mrf.mxu0
    %221 = vmatprep.mubr.f32.mxu0 0.0
    %222 = vmatmul.mubr.f32.gmra.mxu0 %v132
    %v223 = vpop.f32.mrf.mxu0
    %v224 = vadd.f32 0.0, %v223
    %v225 = vpop.f32.mrf.mxu0
    %226 = vmatprep.mubr.f32.mxu0 0.0
    %227 = vmatmul.mubr.f32.gmra.mxu0 %v135
    %v228 = vpop.f32.mrf.mxu0
    %v229 = vadd.f32 0.0, %v228
    %v230 = vpop.f32.mrf.mxu0
    %231 = vmatprep.mubr.f32.mxu0 0.0
    %232 = vmatmul.mubr.f32.gmra.mxu0 %v138
    %v233 = vpop.f32.mrf.mxu0
    %v234 = vadd.f32 0.0, %v233
    %v235 = vpop.f32.mrf.mxu0
    %236 = vmatprep.mubr.f32.mxu0 0.0
    %237 = vmatmul.mubr.f32.gmra.mxu0 %v141
    %v238 = vpop.f32.mrf.mxu0
    %v239 = vadd.f32 0.0, %v238
    %v240 = vpop.f32.mrf.mxu0
    %241 = vmatprep.mubr.f32.mxu0 0.0
    %242 = vmatmul.mubr.f32.gmra.mxu0 %v144
    %v243 = vpop.f32.mrf.mxu0
    %v244 = vadd.f32 0.0, %v243
    %v245 = vpop.f32.mrf.mxu0
    %246 = vmatprep.mubr.f32.mxu0 0.0
    %247 = vmatmul.mubr.f32.gmra.mxu0 %v147
    %v248 = vpop.f32.mrf.mxu0
    %v249 = vadd.f32 0.0, %v248
    %v250 = vpop.f32.mrf.mxu0
    %251 = vmatprep.mubr.f32.mxu0 0.0
    %252 = vmatmul.mubr.f32.gmra.mxu0 %v150
    %v253 = vpop.f32.mrf.mxu0
    %v254 = vadd.f32 0.0, %v253
    %v255 = vpop.f32.mrf.mxu0
    %256 = vdwg.mxu0
    %v257 = vand.u32 2147483647, %v219
    %v258 = vand.u32 2147483647, %v224
    %v259 = vand.u32 2147483647, %v229
    %v260 = vand.u32 2147483647, %v234
    %v261 = vand.u32 2147483647, %v239
    %v262 = vand.u32 2147483647, %v244
    %v263 = vand.u32 2147483647, %v249
    %v264 = vand.u32 2147483647, %v254
    %v265 = vmul.f32 %v257, -0.561879
    %v266 = vmul.f32 %v258, -0.561879
    %v267 = vmul.f32 %v259, -0.561879
    %v268 = vmul.f32 %v260, -0.561879
    %v269 = vmul.f32 %v261, -0.561879
    %v270 = vmul.f32 %v262, -0.561879
    %v271 = vmul.f32 %v263, -0.561879
    %v272 = vmul.f32 %v264, -0.561879
    %v273 = vadd.f32 %v265, 2.22783
    %v274 = vadd.f32 %v266, 2.22783
    %v275 = vadd.f32 %v267, 2.22783
    %v276 = vadd.f32 %v268, 2.22783
    %v277 = vadd.f32 %v269, 2.22783
    %v278 = vadd.f32 %v270, 2.22783
    %v279 = vadd.f32 %v271, 2.22783
    %v280 = vadd.f32 %v272, 2.22783
    %v281 = vmul.f32 %v273, %v257
    %v282 = vmul.f32 %v274, %v258
    %v283 = vmul.f32 %v275, %v259
    %v284 = vmul.f32 %v276, %v260
    %v285 = vmul.f32 %v277, %v261
    %v286 = vmul.f32 %v278, %v262
    %v287 = vmul.f32 %v279, %v263
    %v288 = vmul.f32 %v280, %v264
    %v289 = vadd.f32 %v281, -6.363432
    %v290 = vadd.f32 %v282, -6.363432
    %v291 = vadd.f32 %v283, -6.363432
    %v292 = vadd.f32 %v284, -6.363432
    %v293 = vadd.f32 %v285, -6.363432
    %v294 = vadd.f32 %v286, -6.363432
    %v295 = vadd.f32 %v287, -6.363432
    %v296 = vadd.f32 %v288, -6.363432
    %v297 = vmul.f32 %v289, %v257
    %v298 = vmul.f32 %v290, %v258
    %v299 = vmul.f32 %v291, %v259
    %v300 = vmul.f32 %v292, %v260
    %v301 = vmul.f32 %v293, %v261
    %v302 = vmul.f32 %v294, %v262
    %v303 = vmul.f32 %v295, %v263
    %v304 = vmul.f32 %v296, %v264
    %v305 = vadd.f32 %v297, 47.121864
    %v306 = vadd.f32 %v298, 47.121864
    %v307 = vadd.f32 %v299, 47.121864
    %v308 = vadd.f32 %v300, 47.121864
    %v309 = vadd.f32 %v301, 47.121864
    %v310 = vadd.f32 %v302, 47.121864
    %v311 = vadd.f32 %v303, 47.121864
    %v312 = vadd.f32 %v304, 47.121864
    %v313 = vsub.f32 1.0, %v257
    %v314 = vsub.f32 1.0, %v258
    %v315 = vsub.f32 1.0, %v259
    %v316 = vsub.f32 1.0, %v260
    %v317 = vsub.f32 1.0, %v261
    %v318 = vsub.f32 1.0, %v262
    %v319 = vsub.f32 1.0, %v263
    %v320 = vsub.f32 1.0, %v264
    %v321 = vmax.f32 %v313, 0.0
    %v322 = vmax.f32 %v314, 0.0
    %v323 = vmax.f32 %v315, 0.0
    %v324 = vmax.f32 %v316, 0.0
    %v325 = vmax.f32 %v317, 0.0
    %v326 = vmax.f32 %v318, 0.0
    %v327 = vmax.f32 %v319, 0.0
    %v328 = vmax.f32 %v320, 0.0
    %v329 = vrsqrt.pop %v321
    %v330 = vmul.f32 %v321, %v329
    %vm331 = vcmp.eq.f32.partialorder %v321, inf
    %v332 = vsel %vm331, %v321, %v330
    %vm333 = vcmp.eq.f32.partialorder %v321, 0.0
    %v334 = vand.u32 %v321, 2147483648
    %v335 = vsel %vm333, %v334, %v332
    %v336 = vrsqrt.pop %v322
    %v337 = vmul.f32 %v322, %v336
    %vm338 = vcmp.eq.f32.partialorder %v322, inf
    %v339 = vsel %vm338, %v322, %v337
    %vm340 = vcmp.eq.f32.partialorder %v322, 0.0
    %v341 = vand.u32 %v322, 2147483648
    %v342 = vsel %vm340, %v341, %v339
    %v343 = vrsqrt.pop %v323
    %v344 = vmul.f32 %v323, %v343
    %vm345 = vcmp.eq.f32.partialorder %v323, inf
    %v346 = vsel %vm345, %v323, %v344
    %vm347 = vcmp.eq.f32.partialorder %v323, 0.0
    %v348 = vand.u32 %v323, 2147483648
    %v349 = vsel %vm347, %v348, %v346
    %v350 = vrsqrt.pop %v324
    %v351 = vmul.f32 %v324, %v350
    %vm352 = vcmp.eq.f32.partialorder %v324, inf
    %v353 = vsel %vm352, %v324, %v351
    %vm354 = vcmp.eq.f32.partialorder %v324, 0.0
    %v355 = vand.u32 %v324, 2147483648
    %v356 = vsel %vm354, %v355, %v353
    %v357 = vrsqrt.pop %v325
    %v358 = vmul.f32 %v325, %v357
    %vm359 = vcmp.eq.f32.partialorder %v325, inf
    %v360 = vsel %vm359, %v325, %v358
    %vm361 = vcmp.eq.f32.partialorder %v325, 0.0
    %v362 = vand.u32 %v325, 2147483648
    %v363 = vsel %vm361, %v362, %v360
    %v364 = vrsqrt.pop %v326
    %v365 = vmul.f32 %v326, %v364
    %vm366 = vcmp.eq.f32.partialorder %v326, inf
    %v367 = vsel %vm366, %v326, %v365
    %vm368 = vcmp.eq.f32.partialorder %v326, 0.0
    %v369 = vand.u32 %v326, 2147483648
    %v370 = vsel %vm368, %v369, %v367
    %v371 = vrsqrt.pop %v327
    %v372 = vmul.f32 %v327, %v371
    %vm373 = vcmp.eq.f32.partialorder %v327, inf
    %v374 = vsel %vm373, %v327, %v372
    %vm375 = vcmp.eq.f32.partialorder %v327, 0.0
    %v376 = vand.u32 %v327, 2147483648
    %v377 = vsel %vm375, %v376, %v374
    %v378 = vrsqrt.pop %v328
    %v379 = vmul.f32 %v328, %v378
    %vm380 = vcmp.eq.f32.partialorder %v328, inf
    %v381 = vsel %vm380, %v328, %v379
    %vm382 = vcmp.eq.f32.partialorder %v328, 0.0
    %v383 = vand.u32 %v328, 2147483648
    %v384 = vsel %vm382, %v383, %v381
    %v385 = vmul.f32 %v335, %v305
    %v386 = vmul.f32 %v342, %v306
    %v387 = vmul.f32 %v349, %v307
    %v388 = vmul.f32 %v356, %v308
    %v389 = vmul.f32 %v363, %v309
    %v390 = vmul.f32 %v370, %v310
    %v391 = vmul.f32 %v377, %v311
    %v392 = vmul.f32 %v384, %v312
    %vm393 = vcmp.lt.f32.partialorder %v219, 0.0
    %vm394 = vcmp.lt.f32.partialorder %v224, 0.0
    %vm395 = vcmp.lt.f32.partialorder %v229, 0.0
    %vm396 = vcmp.lt.f32.partialorder %v234, 0.0
    %vm397 = vcmp.lt.f32.partialorder %v239, 0.0
    %vm398 = vcmp.lt.f32.partialorder %v244, 0.0
    %vm399 = vcmp.lt.f32.partialorder %v249, 0.0
    %vm400 = vcmp.lt.f32.partialorder %v254, 0.0
    %v401 = vsub.f32 94.24778, %v385
    %v402 = vsub.f32 94.24778, %v386
    %v403 = vsub.f32 94.24778, %v387
    %v404 = vsub.f32 94.24778, %v388
    %v405 = vsub.f32 94.24778, %v389
    %v406 = vsub.f32 94.24778, %v390
    %v407 = vsub.f32 94.24778, %v391
    %v408 = vsub.f32 94.24778, %v392
    %v409 = vsel %vm393, %v401, %v385
    %v410 = vsel %vm394, %v402, %v386
    %v411 = vsel %vm395, %v403, %v387
    %v412 = vsel %vm396, %v404, %v388
    %v413 = vsel %vm397, %v405, %v389
    %v414 = vsel %vm398, %v406, %v390
    %v415 = vsel %vm399, %v407, %v391
    %v416 = vsel %vm400, %v408, %v392
    %418 = vset.pattern.permute.xlu0 1
    %419 = vperm.xlu0 %418, %v117
    %v420 = vpop.permute.xlu0 %419
    %423 = vset.pattern.permute.xlu0 1
    %424 = vperm.xlu0 %423, %v118
    %v425 = vpop.permute.xlu0 %424
    %428 = vset.pattern.permute.xlu0 1
    %429 = vperm.xlu0 %428, %v119
    %v430 = vpop.permute.xlu0 %429
    %433 = vset.pattern.permute.xlu0 1
    %434 = vperm.xlu0 %433, %v120
    %v435 = vpop.permute.xlu0 %434
    %438 = vset.pattern.permute.xlu0 1
    %439 = vperm.xlu0 %438, %v121
    %v440 = vpop.permute.xlu0 %439
    %443 = vset.pattern.permute.xlu0 1
    %444 = vperm.xlu0 %443, %v122
    %v445 = vpop.permute.xlu0 %444
    %448 = vset.pattern.permute.xlu0 1
    %449 = vperm.xlu0 %448, %v123
    %v450 = vpop.permute.xlu0 %449
    %453 = vset.pattern.permute.xlu0 1
    %454 = vperm.xlu0 %453, %v124
    %v455 = vpop.permute.xlu0 %454
    %v457 = vlaneseq
    %v458 = vshrl.u32 %v457, 7
    %v459 = vsub.s32 0, %v458
    %v460 = vrot.slane %v126, %v459
    %vm461 = vcmp.eq.f32.partialorder %v420, %v460
    %vm462 = vcmp.eq.f32.partialorder %v425, %v460
    %vm463 = vcmp.eq.f32.partialorder %v430, %v460
    %vm464 = vcmp.eq.f32.partialorder %v435, %v460
    %vm465 = vcmp.eq.f32.partialorder %v440, %v460
    %vm466 = vcmp.eq.f32.partialorder %v445, %v460
    %vm467 = vcmp.eq.f32.partialorder %v450, %v460
    %vm468 = vcmp.eq.f32.partialorder %v455, %v460
    %469 = vset.pattern.permute.xlu0 0
    %470 = vperm.xlu0 %469, %v117
    %v471 = vpop.permute.xlu0 %470
    %473 = vset.pattern.permute.xlu0 0
    %474 = vperm.xlu0 %473, %v118
    %v475 = vpop.permute.xlu0 %474
    %477 = vset.pattern.permute.xlu0 0
    %478 = vperm.xlu0 %477, %v119
    %v479 = vpop.permute.xlu0 %478
    %481 = vset.pattern.permute.xlu0 0
    %482 = vperm.xlu0 %481, %v120
    %v483 = vpop.permute.xlu0 %482
    %485 = vset.pattern.permute.xlu0 0
    %486 = vperm.xlu0 %485, %v121
    %v487 = vpop.permute.xlu0 %486
    %489 = vset.pattern.permute.xlu0 0
    %490 = vperm.xlu0 %489, %v122
    %v491 = vpop.permute.xlu0 %490
    %493 = vset.pattern.permute.xlu0 0
    %494 = vperm.xlu0 %493, %v123
    %v495 = vpop.permute.xlu0 %494
    %497 = vset.pattern.permute.xlu0 0
    %498 = vperm.xlu0 %497, %v124
    %v499 = vpop.permute.xlu0 %498
    %v501 = vlaneseq
    %v502 = vshrl.u32 %v501, 7
    %v503 = vsub.s32 0, %v502
    %v504 = vrot.slane %v125, %v503
    %v505 = vadd.f32 %v471, %v504
    %v506 = vadd.f32 %v475, %v504
    %v507 = vadd.f32 %v479, %v504
    %v508 = vadd.f32 %v483, %v504
    %v509 = vadd.f32 %v487, %v504
    %v510 = vadd.f32 %v491, %v504
    %v511 = vadd.f32 %v495, %v504
    %v512 = vadd.f32 %v499, %v504
    %v513 = vsub.f32 %v409, %v505
    %v514 = vsub.f32 %v410, %v506
    %v515 = vsub.f32 %v411, %v507
    %v516 = vsub.f32 %v412, %v508
    %v517 = vsub.f32 %v413, %v509
    %v518 = vsub.f32 %v414, %v510
    %v519 = vsub.f32 %v415, %v511
    %v520 = vsub.f32 %v416, %v512
    %v521 = vsel %vm461, %v513, -300.0
    %v522 = vsel %vm462, %v514, -300.0
    %v523 = vsel %vm463, %v515, -300.0
    %v524 = vsel %vm464, %v516, -300.0
    %v525 = vsel %vm465, %v517, -300.0
    %v526 = vsel %vm466, %v518, -300.0
    %v527 = vsel %vm467, %v519, -300.0
    %v528 = vsel %vm468, %v520, -300.0
    %v529 = vsub.f32 0.0, %v409
    %v530 = vsub.f32 0.0, %v410
    %v531 = vsub.f32 0.0, %v411
    %v532 = vsub.f32 0.0, %v412
    %v533 = vsub.f32 0.0, %v413
    %v534 = vsub.f32 0.0, %v414
    %v535 = vsub.f32 0.0, %v415
    %v536 = vsub.f32 0.0, %v416
    %v537 = vsub.f32 %v529, %v505
    %v538 = vsub.f32 %v530, %v506
    %v539 = vsub.f32 %v531, %v507
    %v540 = vsub.f32 %v532, %v508
    %v541 = vsub.f32 %v533, %v509
    %v542 = vsub.f32 %v534, %v510
    %v543 = vsub.f32 %v535, %v511
    %v544 = vsub.f32 %v536, %v512
    %v545 = vsel %vm461, -300.0, %v537
    %v546 = vsel %vm462, -300.0, %v538
    %v547 = vsel %vm463, -300.0, %v539
    %v548 = vsel %vm464, -300.0, %v540
    %v549 = vsel %vm465, -300.0, %v541
    %v550 = vsel %vm466, -300.0, %v542
    %v551 = vsel %vm467, -300.0, %v543
    %v552 = vsel %vm468, -300.0, %v544
    %v553 = vld [vmem:[#allocation3] sm:$0xff]
    %v554 = vld [vmem:[#allocation3 + $0x8] sm:$0xff]
    %v555 = vld [vmem:[#allocation3 + $0x10] sm:$0xff]
    %v556 = vld [vmem:[#allocation3 + $0x18] sm:$0xff]
    %v557 = vld [vmem:[#allocation3 + $0x20] sm:$0xff]
    %v558 = vld [vmem:[#allocation3 + $0x28] sm:$0xff]
    %v559 = vld [vmem:[#allocation3 + $0x30] sm:$0xff]
    %v560 = vld [vmem:[#allocation3 + $0x38] sm:$0xff]
    %vm561 = vcmask 523264
    %v562 = vsel %vm561, %v521, -inf
    %563 = vmax.xlane.f32.xlu0 %v562
    %v564 = vpop.xlane.xlu0 %563
    %v565 = vsel %vm561, %v522, -inf
    %566 = vmax.xlane.f32.xlu0 %v565
    %v567 = vpop.xlane.xlu0 %566
    %v568 = vsel %vm561, %v523, -inf
    %569 = vmax.xlane.f32.xlu0 %v568
    %v570 = vpop.xlane.xlu0 %569
    %v571 = vsel %vm561, %v524, -inf
    %572 = vmax.xlane.f32.xlu0 %v571
    %v573 = vpop.xlane.xlu0 %572
    %v574 = vsel %vm561, %v525, -inf
    %575 = vmax.xlane.f32.xlu0 %v574
    %v576 = vpop.xlane.xlu0 %575
    %v577 = vsel %vm561, %v526, -inf
    %578 = vmax.xlane.f32.xlu0 %v577
    %v579 = vpop.xlane.xlu0 %578
    %v580 = vsel %vm561, %v527, -inf
    %581 = vmax.xlane.f32.xlu0 %v580
    %v582 = vpop.xlane.xlu0 %581
    %v583 = vsel %vm561, %v528, -inf
    %584 = vmax.xlane.f32.xlu0 %v583
    %v585 = vpop.xlane.xlu0 %584
    %v586 = vmax.f32 %v553, %v564
    %v587 = vmax.f32 %v554, %v567
    %v588 = vmax.f32 %v555, %v570
    %v589 = vmax.f32 %v556, %v573
    %v590 = vmax.f32 %v557, %v576
    %v591 = vmax.f32 %v558, %v579
    %v592 = vmax.f32 %v559, %v582
    %v593 = vmax.f32 %v560, %v585
    %v594 = vld [vmem:[#allocation4] sm:$0xff]
    %v595 = vld [vmem:[#allocation4 + $0x8] sm:$0xff]
    %v596 = vld [vmem:[#allocation4 + $0x10] sm:$0xff]
    %v597 = vld [vmem:[#allocation4 + $0x18] sm:$0xff]
    %v598 = vld [vmem:[#allocation4 + $0x20] sm:$0xff]
    %v599 = vld [vmem:[#allocation4 + $0x28] sm:$0xff]
    %v600 = vld [vmem:[#allocation4 + $0x30] sm:$0xff]
    %v601 = vld [vmem:[#allocation4 + $0x38] sm:$0xff]
    %v602 = vsub.f32 %v553, %v586
    %v603 = vsub.f32 %v554, %v587
    %v604 = vsub.f32 %v555, %v588
    %v605 = vsub.f32 %v556, %v589
    %v606 = vsub.f32 %v557, %v590
    %v607 = vsub.f32 %v558, %v591
    %v608 = vsub.f32 %v559, %v592
    %v609 = vsub.f32 %v560, %v593
    %v610 = vmul.f32 %v602, 1.442695
    %v611 = vpow.pop %v610
    %v612 = vmul.f32 %v603, 1.442695
    %v613 = vpow.pop %v612
    %v614 = vmul.f32 %v604, 1.442695
    %v615 = vpow.pop %v614
    %v616 = vmul.f32 %v605, 1.442695
    %v617 = vpow.pop %v616
    %v618 = vmul.f32 %v606, 1.442695
    %v619 = vpow.pop %v618
    %v620 = vmul.f32 %v607, 1.442695
    %v621 = vpow.pop %v620
    %v622 = vmul.f32 %v608, 1.442695
    %v623 = vpow.pop %v622
    %v624 = vmul.f32 %v609, 1.442695
    %v625 = vpow.pop %v624
    %v626 = vmul.f32 %v594, %v611
    %v627 = vmul.f32 %v595, %v613
    %v628 = vmul.f32 %v596, %v615
    %v629 = vmul.f32 %v597, %v617
    %v630 = vmul.f32 %v598, %v619
    %v631 = vmul.f32 %v599, %v621
    %v632 = vmul.f32 %v600, %v623
    %v633 = vmul.f32 %v601, %v625
    %635 = vset.pattern.permute.xlu0 0
    %636 = vperm.xlu0 %635, %v586
    %v637 = vpop.permute.xlu0 %636
    %640 = vset.pattern.permute.xlu0 0
    %641 = vperm.xlu0 %640, %v587
    %v642 = vpop.permute.xlu0 %641
    %645 = vset.pattern.permute.xlu0 0
    %646 = vperm.xlu0 %645, %v588
    %v647 = vpop.permute.xlu0 %646
    %650 = vset.pattern.permute.xlu0 0
    %651 = vperm.xlu0 %650, %v589
    %v652 = vpop.permute.xlu0 %651
    %655 = vset.pattern.permute.xlu0 0
    %656 = vperm.xlu0 %655, %v590
    %v657 = vpop.permute.xlu0 %656
    %660 = vset.pattern.permute.xlu0 0
    %661 = vperm.xlu0 %660, %v591
    %v662 = vpop.permute.xlu0 %661
    %665 = vset.pattern.permute.xlu0 0
    %666 = vperm.xlu0 %665, %v592
    %v667 = vpop.permute.xlu0 %666
    %670 = vset.pattern.permute.xlu0 0
    %671 = vperm.xlu0 %670, %v593
    %v672 = vpop.permute.xlu0 %671
    %v674 = vsub.f32 %v521, %v637
    %v675 = vsub.f32 %v522, %v642
    %v676 = vsub.f32 %v523, %v647
    %v677 = vsub.f32 %v524, %v652
    %v678 = vsub.f32 %v525, %v657
    %v679 = vsub.f32 %v526, %v662
    %v680 = vsub.f32 %v527, %v667
    %v681 = vsub.f32 %v528, %v672
    %v682 = vmul.f32 %v674, 1.442695
    %v683 = vpow.pop %v682
    %v684 = vmul.f32 %v675, 1.442695
    %v685 = vpow.pop %v684
    %v686 = vmul.f32 %v676, 1.442695
    %v687 = vpow.pop %v686
    %v688 = vmul.f32 %v677, 1.442695
    %v689 = vpow.pop %v688
    %v690 = vmul.f32 %v678, 1.442695
    %v691 = vpow.pop %v690
    %v692 = vmul.f32 %v679, 1.442695
    %v693 = vpow.pop %v692
    %v694 = vmul.f32 %v680, 1.442695
    %v695 = vpow.pop %v694
    %v696 = vmul.f32 %v681, 1.442695
    %v697 = vpow.pop %v696
    %v698 = vsel %vm561, %v683, 0.0
    %699 = vadd.xlane.f32.xlu0 %v698
    %v700 = vpop.xlane.xlu0 %699
    %v701 = vsel %vm561, %v685, 0.0
    %702 = vadd.xlane.f32.xlu0 %v701
    %v703 = vpop.xlane.xlu0 %702
    %v704 = vsel %vm561, %v687, 0.0
    %705 = vadd.xlane.f32.xlu0 %v704
    %v706 = vpop.xlane.xlu0 %705
    %v707 = vsel %vm561, %v689, 0.0
    %708 = vadd.xlane.f32.xlu0 %v707
    %v709 = vpop.xlane.xlu0 %708
    %v710 = vsel %vm561, %v691, 0.0
    %711 = vadd.xlane.f32.xlu0 %v710
    %v712 = vpop.xlane.xlu0 %711
    %v713 = vsel %vm561, %v693, 0.0
    %714 = vadd.xlane.f32.xlu0 %v713
    %v715 = vpop.xlane.xlu0 %714
    %v716 = vsel %vm561, %v695, 0.0
    %717 = vadd.xlane.f32.xlu0 %v716
    %v718 = vpop.xlane.xlu0 %717
    %v719 = vsel %vm561, %v697, 0.0
    %720 = vadd.xlane.f32.xlu0 %v719
    %v721 = vpop.xlane.xlu0 %720
    %v722 = vadd.f32 %v626, %v700
    %v723 = vadd.f32 %v627, %v703
    %v724 = vadd.f32 %v628, %v706
    %v725 = vadd.f32 %v629, %v709
    %v726 = vadd.f32 %v630, %v712
    %v727 = vadd.f32 %v631, %v715
    %v728 = vadd.f32 %v632, %v718
    %v729 = vadd.f32 %v633, %v721
    %vm730 = vcmask 7168
    %731 = vst.msk [vmem:[#allocation4] sm:$0xff] %vm730, %v722
    %732 = vst.msk [vmem:[#allocation4 + $0x8] sm:$0xff] %vm730, %v723
    %733 = vst.msk [vmem:[#allocation4 + $0x10] sm:$0xff] %vm730, %v724
    %734 = vst.msk [vmem:[#allocation4 + $0x18] sm:$0xff] %vm730, %v725
    %735 = vst.msk [vmem:[#allocation4 + $0x20] sm:$0xff] %vm730, %v726
    %736 = vst.msk [vmem:[#allocation4 + $0x28] sm:$0xff] %vm730, %v727
    %737 = vst.msk [vmem:[#allocation4 + $0x30] sm:$0xff] %vm730, %v728
    %738 = vst.msk [vmem:[#allocation4 + $0x38] sm:$0xff] %vm730, %v729
    %739 = vst.msk [vmem:[#allocation3] sm:$0xff] %vm730, %v586
    %740 = vst.msk [vmem:[#allocation3 + $0x8] sm:$0xff] %vm730, %v587
    %741 = vst.msk [vmem:[#allocation3 + $0x10] sm:$0xff] %vm730, %v588
    %742 = vst.msk [vmem:[#allocation3 + $0x18] sm:$0xff] %vm730, %v589
    %743 = vst.msk [vmem:[#allocation3 + $0x20] sm:$0xff] %vm730, %v590
    %744 = vst.msk [vmem:[#allocation3 + $0x28] sm:$0xff] %vm730, %v591
    %745 = vst.msk [vmem:[#allocation3 + $0x30] sm:$0xff] %vm730, %v592
    %746 = vst.msk [vmem:[#allocation3 + $0x38] sm:$0xff] %vm730, %v593
    %v747 = vld [vmem:[#allocation5] sm:$0xff]
    %v748 = vld [vmem:[#allocation5 + $0x8] sm:$0xff]
    %v749 = vld [vmem:[#allocation5 + $0x10] sm:$0xff]
    %v750 = vld [vmem:[#allocation5 + $0x18] sm:$0xff]
    %v751 = vld [vmem:[#allocation5 + $0x20] sm:$0xff]
    %v752 = vld [vmem:[#allocation5 + $0x28] sm:$0xff]
    %v753 = vld [vmem:[#allocation5 + $0x30] sm:$0xff]
    %v754 = vld [vmem:[#allocation5 + $0x38] sm:$0xff]
    %v755 = vsel %vm561, %v545, -inf
    %756 = vmax.xlane.f32.xlu0 %v755
    %v757 = vpop.xlane.xlu0 %756
    %v758 = vsel %vm561, %v546, -inf
    %759 = vmax.xlane.f32.xlu0 %v758
    %v760 = vpop.xlane.xlu0 %759
    %v761 = vsel %vm561, %v547, -inf
    %762 = vmax.xlane.f32.xlu0 %v761
    %v763 = vpop.xlane.xlu0 %762
    %v764 = vsel %vm561, %v548, -inf
    %765 = vmax.xlane.f32.xlu0 %v764
    %v766 = vpop.xlane.xlu0 %765
    %v767 = vsel %vm561, %v549, -inf
    %768 = vmax.xlane.f32.xlu0 %v767
    %v769 = vpop.xlane.xlu0 %768
    %v770 = vsel %vm561, %v550, -inf
    %771 = vmax.xlane.f32.xlu0 %v770
    %v772 = vpop.xlane.xlu0 %771
    %v773 = vsel %vm561, %v551, -inf
    %774 = vmax.xlane.f32.xlu0 %v773
    %v775 = vpop.xlane.xlu0 %774
    %v776 = vsel %vm561, %v552, -inf
    %777 = vmax.xlane.f32.xlu0 %v776
    %v778 = vpop.xlane.xlu0 %777
    %v779 = vmax.f32 %v747, %v757
    %v780 = vmax.f32 %v748, %v760
    %v781 = vmax.f32 %v749, %v763
    %v782 = vmax.f32 %v750, %v766
    %v783 = vmax.f32 %v751, %v769
    %v784 = vmax.f32 %v752, %v772
    %v785 = vmax.f32 %v753, %v775
    %v786 = vmax.f32 %v754, %v778
    %v787 = vld [vmem:[#allocation6] sm:$0xff]
    %v788 = vld [vmem:[#allocation6 + $0x8] sm:$0xff]
    %v789 = vld [vmem:[#allocation6 + $0x10] sm:$0xff]
    %v790 = vld [vmem:[#allocation6 + $0x18] sm:$0xff]
    %v791 = vld [vmem:[#allocation6 + $0x20] sm:$0xff]
    %v792 = vld [vmem:[#allocation6 + $0x28] sm:$0xff]
    %v793 = vld [vmem:[#allocation6 + $0x30] sm:$0xff]
    %v794 = vld [vmem:[#allocation6 + $0x38] sm:$0xff]
    %v795 = vsub.f32 %v747, %v779
    %v796 = vsub.f32 %v748, %v780
    %v797 = vsub.f32 %v749, %v781
    %v798 = vsub.f32 %v750, %v782
    %v799 = vsub.f32 %v751, %v783
    %v800 = vsub.f32 %v752, %v784
    %v801 = vsub.f32 %v753, %v785
    %v802 = vsub.f32 %v754, %v786
    %v803 = vmul.f32 %v795, 1.442695
    %v804 = vpow.pop %v803
    %v805 = vmul.f32 %v796, 1.442695
    %v806 = vpow.pop %v805
    %v807 = vmul.f32 %v797, 1.442695
    %v808 = vpow.pop %v807
    %v809 = vmul.f32 %v798, 1.442695
    %v810 = vpow.pop %v809
    %v811 = vmul.f32 %v799, 1.442695
    %v812 = vpow.pop %v811
    %v813 = vmul.f32 %v800, 1.442695
    %v814 = vpow.pop %v813
    %v815 = vmul.f32 %v801, 1.442695
    %v816 = vpow.pop %v815
    %v817 = vmul.f32 %v802, 1.442695
    %v818 = vpow.pop %v817
    %v819 = vmul.f32 %v787, %v804
    %v820 = vmul.f32 %v788, %v806
    %v821 = vmul.f32 %v789, %v808
    %v822 = vmul.f32 %v790, %v810
    %v823 = vmul.f32 %v791, %v812
    %v824 = vmul.f32 %v792, %v814
    %v825 = vmul.f32 %v793, %v816
    %v826 = vmul.f32 %v794, %v818
    %828 = vset.pattern.permute.xlu0 0
    %829 = vperm.xlu0 %828, %v779
    %v830 = vpop.permute.xlu0 %829
    %833 = vset.pattern.permute.xlu0 0
    %834 = vperm.xlu0 %833, %v780
    %v835 = vpop.permute.xlu0 %834
    %838 = vset.pattern.permute.xlu0 0
    %839 = vperm.xlu0 %838, %v781
    %v840 = vpop.permute.xlu0 %839
    %843 = vset.pattern.permute.xlu0 0
    %844 = vperm.xlu0 %843, %v782
    %v845 = vpop.permute.xlu0 %844
    %848 = vset.pattern.permute.xlu0 0
    %849 = vperm.xlu0 %848, %v783
    %v850 = vpop.permute.xlu0 %849
    %853 = vset.pattern.permute.xlu0 0
    %854 = vperm.xlu0 %853, %v784
    %v855 = vpop.permute.xlu0 %854
    %858 = vset.pattern.permute.xlu0 0
    %859 = vperm.xlu0 %858, %v785
    %v860 = vpop.permute.xlu0 %859
    %863 = vset.pattern.permute.xlu0 0
    %864 = vperm.xlu0 %863, %v786
    %v865 = vpop.permute.xlu0 %864
    %v867 = vsub.f32 %v545, %v830
    %v868 = vsub.f32 %v546, %v835
    %v869 = vsub.f32 %v547, %v840
    %v870 = vsub.f32 %v548, %v845
    %v871 = vsub.f32 %v549, %v850
    %v872 = vsub.f32 %v550, %v855
    %v873 = vsub.f32 %v551, %v860
    %v874 = vsub.f32 %v552, %v865
    %v875 = vmul.f32 %v867, 1.442695
    %v876 = vpow.pop %v875
    %v877 = vmul.f32 %v868, 1.442695
    %v878 = vpow.pop %v877
    %v879 = vmul.f32 %v869, 1.442695
    %v880 = vpow.pop %v879
    %v881 = vmul.f32 %v870, 1.442695
    %v882 = vpow.pop %v881
    %v883 = vmul.f32 %v871, 1.442695
    %v884 = vpow.pop %v883
    %v885 = vmul.f32 %v872, 1.442695
    %v886 = vpow.pop %v885
    %v887 = vmul.f32 %v873, 1.442695
    %v888 = vpow.pop %v887
    %v889 = vmul.f32 %v874, 1.442695
    %v890 = vpow.pop %v889
    %v891 = vsel %vm561, %v876, 0.0
    %892 = vadd.xlane.f32.xlu0 %v891
    %v893 = vpop.xlane.xlu0 %892
    %v894 = vsel %vm561, %v878, 0.0
    %895 = vadd.xlane.f32.xlu0 %v894
    %v896 = vpop.xlane.xlu0 %895
    %v897 = vsel %vm561, %v880, 0.0
    %898 = vadd.xlane.f32.xlu0 %v897
    %v899 = vpop.xlane.xlu0 %898
    %v900 = vsel %vm561, %v882, 0.0
    %901 = vadd.xlane.f32.xlu0 %v900
    %v902 = vpop.xlane.xlu0 %901
    %v903 = vsel %vm561, %v884, 0.0
    %904 = vadd.xlane.f32.xlu0 %v903
    %v905 = vpop.xlane.xlu0 %904
    %v906 = vsel %vm561, %v886, 0.0
    %907 = vadd.xlane.f32.xlu0 %v906
    %v908 = vpop.xlane.xlu0 %907
    %v909 = vsel %vm561, %v888, 0.0
    %910 = vadd.xlane.f32.xlu0 %v909
    %v911 = vpop.xlane.xlu0 %910
    %v912 = vsel %vm561, %v890, 0.0
    %913 = vadd.xlane.f32.xlu0 %v912
    %v914 = vpop.xlane.xlu0 %913
    %v915 = vadd.f32 %v819, %v893
    %v916 = vadd.f32 %v820, %v896
    %v917 = vadd.f32 %v821, %v899
    %v918 = vadd.f32 %v822, %v902
    %v919 = vadd.f32 %v823, %v905
    %v920 = vadd.f32 %v824, %v908
    %v921 = vadd.f32 %v825, %v911
    %v922 = vadd.f32 %v826, %v914
    %923 = vst.msk [vmem:[#allocation6] sm:$0xff] %vm730, %v915
    %924 = vst.msk [vmem:[#allocation6 + $0x8] sm:$0xff] %vm730, %v916
    %925 = vst.msk [vmem:[#allocation6 + $0x10] sm:$0xff] %vm730, %v917
    %926 = vst.msk [vmem:[#allocation6 + $0x18] sm:$0xff] %vm730, %v918
    %927 = vst.msk [vmem:[#allocation6 + $0x20] sm:$0xff] %vm730, %v919
    %928 = vst.msk [vmem:[#allocation6 + $0x28] sm:$0xff] %vm730, %v920
    %929 = vst.msk [vmem:[#allocation6 + $0x30] sm:$0xff] %vm730, %v921
    %930 = vst.msk [vmem:[#allocation6 + $0x38] sm:$0xff] %vm730, %v922
    %931 = vst.msk [vmem:[#allocation5] sm:$0xff] %vm730, %v779
    %932 = vst.msk [vmem:[#allocation5 + $0x8] sm:$0xff] %vm730, %v780
    %933 = vst.msk [vmem:[#allocation5 + $0x10] sm:$0xff] %vm730, %v781
    %934 = vst.msk [vmem:[#allocation5 + $0x18] sm:$0xff] %vm730, %v782
    %935 = vst.msk [vmem:[#allocation5 + $0x20] sm:$0xff] %vm730, %v783
    %936 = vst.msk [vmem:[#allocation5 + $0x28] sm:$0xff] %vm730, %v784
    %937 = vst.msk [vmem:[#allocation5 + $0x30] sm:$0xff] %vm730, %v785
    %938 = vst.msk [vmem:[#allocation5 + $0x38] sm:$0xff] %vm730, %v786
    // Predicated region
    $region26: #{tpu_custom_call.1} parent=1 // pred_check
      %p939 = pneg %p63
    $region27: #{tpu_custom_call.1} parent=1 // pred_check_branch
      %941 = sbr.rel (%p939) target = $region29
    $region28: #{tpu_custom_call.1} parent=1 // pred_region
      %v942 = vld [vmem:[#allocation3] sm:$0xff]
      %v943 = vld [vmem:[#allocation3 + $0x8] sm:$0xff]
      %v944 = vld [vmem:[#allocation3 + $0x10] sm:$0xff]
      %v945 = vld [vmem:[#allocation3 + $0x18] sm:$0xff]
      %v946 = vld [vmem:[#allocation3 + $0x20] sm:$0xff]
      %v947 = vld [vmem:[#allocation3 + $0x28] sm:$0xff]
      %v948 = vld [vmem:[#allocation3 + $0x30] sm:$0xff]
      %v949 = vld [vmem:[#allocation3 + $0x38] sm:$0xff]
      %v950 = vld [vmem:[#allocation4] sm:$0xff]
      %v951 = vld [vmem:[#allocation4 + $0x8] sm:$0xff]
      %v952 = vld [vmem:[#allocation4 + $0x10] sm:$0xff]
      %v953 = vld [vmem:[#allocation4 + $0x18] sm:$0xff]
      %v954 = vld [vmem:[#allocation4 + $0x20] sm:$0xff]
      %v955 = vld [vmem:[#allocation4 + $0x28] sm:$0xff]
      %v956 = vld [vmem:[#allocation4 + $0x30] sm:$0xff]
      %v957 = vld [vmem:[#allocation4 + $0x38] sm:$0xff]
      %v958 = vlog2.pop %v950
      %v959 = vmul.f32 %v958, 0.6931472
      %v960 = vlog2.pop %v951
      %v961 = vmul.f32 %v960, 0.6931472
      %v962 = vlog2.pop %v952
      %v963 = vmul.f32 %v962, 0.6931472
      %v964 = vlog2.pop %v953
      %v965 = vmul.f32 %v964, 0.6931472
      %v966 = vlog2.pop %v954
      %v967 = vmul.f32 %v966, 0.6931472
      %v968 = vlog2.pop %v955
      %v969 = vmul.f32 %v968, 0.6931472
      %v970 = vlog2.pop %v956
      %v971 = vmul.f32 %v970, 0.6931472
      %v972 = vlog2.pop %v957
      %v973 = vmul.f32 %v972, 0.6931472
      %v974 = vadd.f32 %v942, %v959
      %v975 = vadd.f32 %v943, %v961
      %v976 = vadd.f32 %v944, %v963
      %v977 = vadd.f32 %v945, %v965
      %v978 = vadd.f32 %v946, %v967
      %v979 = vadd.f32 %v947, %v969
      %v980 = vadd.f32 %v948, %v971
      %v981 = vadd.f32 %v949, %v973
      %v982 = vld [vmem:[#allocation5] sm:$0xff]
      %v983 = vld [vmem:[#allocation5 + $0x8] sm:$0xff]
      %v984 = vld [vmem:[#allocation5 + $0x10] sm:$0xff]
      %v985 = vld [vmem:[#allocation5 + $0x18] sm:$0xff]
      %v986 = vld [vmem:[#allocation5 + $0x20] sm:$0xff]
      %v987 = vld [vmem:[#allocation5 + $0x28] sm:$0xff]
      %v988 = vld [vmem:[#allocation5 + $0x30] sm:$0xff]
      %v989 = vld [vmem:[#allocation5 + $0x38] sm:$0xff]
      %v990 = vadd.f32 %v974, %v982
      %v991 = vadd.f32 %v975, %v983
      %v992 = vadd.f32 %v976, %v984
      %v993 = vadd.f32 %v977, %v985
      %v994 = vadd.f32 %v978, %v986
      %v995 = vadd.f32 %v979, %v987
      %v996 = vadd.f32 %v980, %v988
      %v997 = vadd.f32 %v981, %v989
      %v998 = vld [vmem:[#allocation6] sm:$0xff]
      %v999 = vld [vmem:[#allocation6 + $0x8] sm:$0xff]
      %v1000 = vld [vmem:[#allocation6 + $0x10] sm:$0xff]
      %v1001 = vld [vmem:[#allocation6 + $0x18] sm:$0xff]
      %v1002 = vld [vmem:[#allocation6 + $0x20] sm:$0xff]
      %v1003 = vld [vmem:[#allocation6 + $0x28] sm:$0xff]
      %v1004 = vld [vmem:[#allocation6 + $0x30] sm:$0xff]
      %v1005 = vld [vmem:[#allocation6 + $0x38] sm:$0xff]
      %v1006 = vlog2.pop %v998
      %v1007 = vmul.f32 %v1006, 0.6931472
      %v1008 = vlog2.pop %v999
      %v1009 = vmul.f32 %v1008, 0.6931472
      %v1010 = vlog2.pop %v1000
      %v1011 = vmul.f32 %v1010, 0.6931472
      %v1012 = vlog2.pop %v1001
      %v1013 = vmul.f32 %v1012, 0.6931472
      %v1014 = vlog2.pop %v1002
      %v1015 = vmul.f32 %v1014, 0.6931472
      %v1016 = vlog2.pop %v1003
      %v1017 = vmul.f32 %v1016, 0.6931472
      %v1018 = vlog2.pop %v1004
      %v1019 = vmul.f32 %v1018, 0.6931472
      %v1020 = vlog2.pop %v1005
      %v1021 = vmul.f32 %v1020, 0.6931472
      %v1022 = vadd.f32 %v990, %v1007
      %v1023 = vadd.f32 %v991, %v1009
      %v1024 = vadd.f32 %v992, %v1011
      %v1025 = vadd.f32 %v993, %v1013
      %v1026 = vadd.f32 %v994, %v1015
      %v1027 = vadd.f32 %v995, %v1017
      %v1028 = vadd.f32 %v996, %v1019
      %v1029 = vadd.f32 %v997, %v1021
      %v1030 = vmax.f32 %v1022, 0.0
      %v1031 = vmax.f32 %v1023, 0.0
      %v1032 = vmax.f32 %v1024, 0.0
      %v1033 = vmax.f32 %v1025, 0.0
      %v1034 = vmax.f32 %v1026, 0.0
      %v1035 = vmax.f32 %v1027, 0.0
      %v1036 = vmax.f32 %v1028, 0.0
      %v1037 = vmax.f32 %v1029, 0.0
      %v1038 = vand.u32 2147483647, %v1022
      %v1039 = vand.u32 2147483647, %v1023
      %v1040 = vand.u32 2147483647, %v1024
      %v1041 = vand.u32 2147483647, %v1025
      %v1042 = vand.u32 2147483647, %v1026
      %v1043 = vand.u32 2147483647, %v1027
      %v1044 = vand.u32 2147483647, %v1028
      %v1045 = vand.u32 2147483647, %v1029
      %v1046 = vsub.f32 0.0, %v1038
      %v1047 = vsub.f32 0.0, %v1039
      %v1048 = vsub.f32 0.0, %v1040
      %v1049 = vsub.f32 0.0, %v1041
      %v1050 = vsub.f32 0.0, %v1042
      %v1051 = vsub.f32 0.0, %v1043
      %v1052 = vsub.f32 0.0, %v1044
      %v1053 = vsub.f32 0.0, %v1045
      %v1054 = vmul.f32 %v1046, 1.442695
      %v1055 = vpow.pop %v1054
      %v1056 = vmul.f32 %v1047, 1.442695
      %v1057 = vpow.pop %v1056
      %v1058 = vmul.f32 %v1048, 1.442695
      %v1059 = vpow.pop %v1058
      %v1060 = vmul.f32 %v1049, 1.442695
      %v1061 = vpow.pop %v1060
      %v1062 = vmul.f32 %v1050, 1.442695
      %v1063 = vpow.pop %v1062
      %v1064 = vmul.f32 %v1051, 1.442695
      %v1065 = vpow.pop %v1064
      %v1066 = vmul.f32 %v1052, 1.442695
      %v1067 = vpow.pop %v1066
      %v1068 = vmul.f32 %v1053, 1.442695
      %v1069 = vpow.pop %v1068
      %v1070 = vadd.f32 %v1055, 1.0
      %v1071 = vadd.f32 %v1057, 1.0
      %v1072 = vadd.f32 %v1059, 1.0
      %v1073 = vadd.f32 %v1061, 1.0
      %v1074 = vadd.f32 %v1063, 1.0
      %v1075 = vadd.f32 %v1065, 1.0
      %v1076 = vadd.f32 %v1067, 1.0
      %v1077 = vadd.f32 %v1069, 1.0
      %v1078 = vlog2.pop %v1070
      %v1079 = vmul.f32 %v1078, 0.6931472
      %v1080 = vlog2.pop %v1071
      %v1081 = vmul.f32 %v1080, 0.6931472
      %v1082 = vlog2.pop %v1072
      %v1083 = vmul.f32 %v1082, 0.6931472
      %v1084 = vlog2.pop %v1073
      %v1085 = vmul.f32 %v1084, 0.6931472
      %v1086 = vlog2.pop %v1074
      %v1087 = vmul.f32 %v1086, 0.6931472
      %v1088 = vlog2.pop %v1075
      %v1089 = vmul.f32 %v1088, 0.6931472
      %v1090 = vlog2.pop %v1076
      %v1091 = vmul.f32 %v1090, 0.6931472
      %v1092 = vlog2.pop %v1077
      %v1093 = vmul.f32 %v1092, 0.6931472
      %v1094 = vadd.f32 %v1030, %v1079
      %v1095 = vadd.f32 %v1031, %v1081
      %v1096 = vadd.f32 %v1032, %v1083
      %v1097 = vadd.f32 %v1033, %v1085
      %v1098 = vadd.f32 %v1034, %v1087
      %v1099 = vadd.f32 %v1035, %v1089
      %v1100 = vadd.f32 %v1036, %v1091
      %v1101 = vadd.f32 %v1037, %v1093
      %v1102 = vld [vmem:[#allocation2] sm:$0x1]
      %v1103 = vsel %vm730, %v1094, 0.0
      %v1104 = vsel %vm730, %v1095, 0.0
      %v1105 = vadd.f32 %v1103, %v1104
      %v1106 = vsel %vm730, %v1096, 0.0
      %v1107 = vadd.f32 %v1105, %v1106
      %v1108 = vsel %vm730, %v1097, 0.0
      %v1109 = vadd.f32 %v1107, %v1108
      %v1110 = vsel %vm730, %v1098, 0.0
      %v1111 = vadd.f32 %v1109, %v1110
      %v1112 = vsel %vm730, %v1099, 0.0
      %v1113 = vadd.f32 %v1111, %v1112
      %v1114 = vsel %vm730, %v1100, 0.0
      %v1115 = vadd.f32 %v1113, %v1114
      %v1116 = vsel %vm730, %v1101, 0.0
      %v1117 = vadd.f32 %v1115, %v1116
      %v1118 = vrot.slane %v1117, 4
      %v1119 = vadd.f32 %v1117, %v1118
      %v1120 = vrot.slane %v1119, 2
      %v1121 = vadd.f32 %v1119, %v1120
      %v1122 = vrot.slane %v1121, 1
      %v1123 = vadd.f32 %v1121, %v1122
      %1125 = vset.pattern.permute.xlu0 0
      %1126 = vperm.xlu0 %1125, %v1123
      %v1127 = vpop.permute.xlu0 %1126
      %v1129 = vadd.f32 %v1102, %v1127
      %1130 = vst [vmem:[#allocation2] sm:$0x1] %v1129
    $region29: #{tpu_custom_call.1} parent=1 // pred_fallthru
      _
    // Predicated region
    $region30: #{tpu_custom_call.1} parent=1 // pred_check
      _
    $region31: #{tpu_custom_call.1} parent=1 // pred_check_branch
      %1132 = sbr.rel (%p64) target = $region33
    $region32: #{tpu_custom_call.1} parent=1 // pred_region
      %v1133 = vld [vmem:[#allocation2] sm:$0x1]
      %1134 = vst [vmem:[#allocation7] sm:$0x1] %v1133
    $region33: #{tpu_custom_call.1} parent=1 // pred_fallthru
      _
    // Predicated region
    $region34: #{tpu_custom_call.1} parent=1 // pred_check
      _
    $region35: #{tpu_custom_call.1} parent=1 // pred_check_branch
      %1136 = sbr.rel (0) target = $region37
    $region36: #{tpu_custom_call.1} parent=1 // pred_region
      %s1138 = ssub.s32 16, 16
      %1139 = vsyncadd [#allocation8], %s1138
      %s1141 = sshll.u32 [#allocation7], 4
      %s1142 = int_to_ptr.vmem [resolvable:$true] %s1141
      %1144 = dma.vmem_to_hbm [thread:$0]  %s1142, 16, %s4, [#allocation8]
    $region37: #{tpu_custom_call.1} parent=1 // pred_fallthru
      _
    // Predicated region
    $region38: #{tpu_custom_call.1} parent=1 // pred_check
      _
    $region39: #{tpu_custom_call.1} parent=1 // pred_check_branch
      %1146 = sbr.rel (0) target = $region41
    $region40: #{tpu_custom_call.1} parent=1 // pred_region
      %1147 = dma.done [#allocation8], 16
    $region41: #{tpu_custom_call.1} parent=1 // pred_fallthru
      _
    %1148 = vsyncpa [#allocation8], 1

</llo_original>
